<compile_context>
chip_gen: v6e
topology: v6e:2x2x1
jax: 0.10.0
libtpu: 0.0.40
codegen_flags: <defaults>
</compile_context>

<pallas_src>
import functools

import jax
import jax.numpy as jnp
from jax import lax
from jax.experimental import pallas as pl
from jax.experimental.pallas import tpu as pltpu


FILTER_SIZES = (2, 3, 4)
FC_PAD_N = 128   # lane-dense FC output width (logits padded from class_len -> 128)


# ---------------------------------------------------------------------------
# Fused kernel: embedding -> unfold (rolls) -> one conv matmul -> max -> FC
# ---------------------------------------------------------------------------
def _textcnn_kernel(tok_ref, table_ref, wconv_ref, bconv_ref, mask_ref,
                    fcw_ref, fcb_ref, out_ref, *, batch, seq_len, filter_num,
                    num_groups, kmax):
    """
    tok_ref   : (B*L, 1)       int32  token ids (batch-major, time-minor)
    table_ref : (V, E)         bf16   embedding table
    wconv_ref : (KMAX*E, G*F)  bf16   packed conv weights (tap-major rows,
                                      group-major cols; taps i >= k zero-padded)
    bconv_ref : (1, G*F)       f32    concatenated conv biases
    mask_ref  : (L, G*F)       f32    additive time-validity mask (0 / -inf)
    fcw_ref   : (G*F, 128)     bf16   FC weight, N zero-padded to lane-dense 128
    fcb_ref   : (1, 128)       f32    FC bias, zero-padded
    out_ref   : (B, 128)       f32    padded logits (wrapper slices [:, :C])
    """
    B, L, F, G = batch, seq_len, filter_num, num_groups
    BL = B * L
    V, E = table_ref.shape

    # ---- embedding lookup as a one-hot matmul (table is VMEM resident) ----
    # TODO(synk): for a production-size vocab keep the table in HBM
    # (memory_space=pl.ANY) and DMA-gather only the B*L rows that are needed.
    tok = tok_ref[...]                                               # (BL, 1) int32
    vocab_iota = lax.broadcasted_iota(jnp.int32, (BL, V), 1)
    onehot = (tok == vocab_iota).astype(table_ref.dtype)             # (BL, V) bf16
    emb = jnp.dot(onehot, table_ref[...],
                  preferred_element_type=jnp.float32)                # (BL, E) f32 (exact)

    # ---- time-unfold via XLU sublane rolls (no (BL,BL) shift matmuls) ----
    # Tap i needs row r+i; roll by BL-i == jnp.roll(emb, -i, axis=0).  Rows that
    # wrap around the end or spill across a batch boundary only appear at time
    # positions t > L-k for every group whose tap-i weight is non-zero (weights
    # for taps i >= k are zero-padded), and those positions are -inf masked
    # before the max, so the flattened-batch formulation stays exact.
    taps = [emb]
    for i in range(1, kmax):
        taps.append(pltpu.roll(emb, shift=BL - i, axis=0))
    emb_unfold = jnp.concatenate(taps, axis=1).astype(wconv_ref.dtype)  # (BL, kmax*E)

    # ---- all conv branches in ONE K = kmax*E MXU pass ----
    s = jnp.dot(emb_unfold, wconv_ref[...],
                preferred_element_type=jnp.float32)                  # (BL, G*F) f32

    # ---- per-group masked max over valid time steps (256-lane slabs) ----
    pooled = []
    for g in range(G):
        c0 = g * F
        s_g = s[:, c0:c0 + F].reshape(B, L, F)                       # (B, L, F)
        s_g = s_g + mask_ref[:, c0:c0 + F][None]                     # 0 / -inf additive
        pooled.append(jnp.max(s_g, axis=1))                          # (B, F)
    pooled = jnp.concatenate(pooled, axis=1)                         # (B, G*F) f32

    # ---- bias + ReLU after the max (exact: monotone per column), then FC ----
    pooled = jnp.maximum(pooled + bconv_ref[...], 0.0)               # (B, G*F) f32
    # Dropout is identity at inference time.
    out_ref[...] = (
        jnp.dot(pooled.astype(fcw_ref.dtype), fcw_ref[...],
                preferred_element_type=jnp.float32)
        + fcb_ref[...]
    )


# ---------------------------------------------------------------------------
# Wrapper: one gridless pallas_call, everything whole-array resident in VMEM
# ---------------------------------------------------------------------------
@functools.partial(jax.jit, static_argnames=("class_len",))
def cnn_forward(kparams, tokens, *, class_len):
    """tokens: (B, L) int32 token ids -> (B, class_len) f32 logits."""
    B, L = tokens.shape
    if L < max(FILTER_SIZES):
        raise ValueError("seq_len must be >= max(FILTER_SIZES) "
                         f"({L} < {max(FILTER_SIZES)})")
    G = len(FILTER_SIZES)
    GF = kparams["conv_b"].shape[1]
    kernel = functools.partial(
        _textcnn_kernel, batch=B, seq_len=L, filter_num=GF // G,
        num_groups=G, kmax=max(FILTER_SIZES))
    vmem = pl.BlockSpec(memory_space=pltpu.MemorySpace.VMEM)
    # TODO(synk): for non-toy B*L, add a ("parallel",) grid over row blocks so the
    # two v7x TensorCores split the batch and per-step VMEM stays bounded.
    out_pad = pl.pallas_call(
        kernel,
        out_shape=jax.ShapeDtypeStruct((B, FC_PAD_N), jnp.float32),
        in_specs=[vmem] * 7,
        out_specs=vmem,
    )(tokens.reshape(B * L, 1), kparams["embedding"], kparams["conv_w"],
      kparams["conv_b"], kparams["time_mask"], kparams["fc_w"], kparams["fc_b"])
    return out_pad[:, :class_len]


# ---------------------------------------------------------------------------
# Parameters
# ---------------------------------------------------------------------------
def init_params(key, vocab_size, embed_dim, filter_num, class_len):
    keys = jax.random.split(key, 2 + 2 * len(FILTER_SIZES) + 2)
    params = {}
    params["embedding"] = jax.random.normal(
        keys[0], (vocab_size, embed_dim), jnp.float32) * 0.1
    params["conv_w"] = []
    params["conv_b"] = []
    for i, k in enumerate(FILTER_SIZES):
        # PyTorch Conv2d weight (F, 1, k, E) reshaped to matmul layout (k*E, F):
        # W_mat[i*E + e, f] == W_torch[f, 0, i, e]
        w = jax.random.normal(keys[1 + 2 * i], (k * embed_dim, filter_num),
                              jnp.float32) * 0.05
        b = jax.random.normal(keys[2 + 2 * i], (1, filter_num),
                              jnp.float32) * 0.05
        params["conv_w"].append(w)
        params["conv_b"].append(b)
    feat_dim = filter_num * len(FILTER_SIZES)
    params["fc_w"] = jax.random.normal(keys[-2], (feat_dim, class_len),
                                       jnp.float32) * 0.05
    params["fc_b"] = jax.random.normal(keys[-1], (1, class_len),
                                       jnp.float32) * 0.05
    return params


def prepare_kernel_params(params, seq_len):
    """Pack weights for the fused kernel: bf16 matmul operands, f32 biases,
    precomputed 0/-inf time mask, lane-dense (N=128) FC head."""
    embed_dim = params["embedding"].shape[1]
    filter_num = params["conv_w"][0].shape[1]
    kmax = max(FILTER_SIZES)

    # Packed conv weight: zero-pad missing taps so every group spans kmax*E rows.
    packed = []
    for k, w in zip(FILTER_SIZES, params["conv_w"]):
        packed.append(jnp.pad(w, ((0, (kmax - k) * embed_dim), (0, 0))))
    conv_w = jnp.concatenate(packed, axis=1).astype(jnp.bfloat16)    # (kmax*E, G*F)
    conv_b = jnp.concatenate(params["conv_b"], axis=1)               # (1, G*F) f32

    # Additive time-validity mask, built ONCE host-side (kernel just adds it).
    t = jnp.arange(seq_len)[:, None]                                 # (L, 1)
    mask_cols = []
    for k in FILTER_SIZES:
        valid = t <= (seq_len - k)                                   # last valid t = L-k
        mask_cols.append(jnp.broadcast_to(
            jnp.where(valid, 0.0, -jnp.inf).astype(jnp.float32),
            (seq_len, filter_num)))
    time_mask = jnp.concatenate(mask_cols, axis=1)                   # (L, G*F) f32

    # Lane-dense FC head: pad N from class_len to 128.
    class_len = params["fc_w"].shape[1]
    n_pad = FC_PAD_N - class_len
    fc_w = jnp.pad(params["fc_w"], ((0, 0), (0, n_pad))).astype(jnp.bfloat16)
    fc_b = jnp.pad(params["fc_b"], ((0, 0), (0, n_pad)))

    return {
        "embedding": params["embedding"].astype(jnp.bfloat16),
        "conv_w": conv_w,
        "conv_b": conv_b,
        "time_mask": time_mask,
        "fc_w": fc_w,
        "fc_b": fc_b,
    }


# ---------------------------------------------------------------------------
# Pure-JAX f32 reference of the PyTorch forward (for validation)
# ---------------------------------------------------------------------------
def cnn_reference(params, tokens):
    emb = jnp.take(params["embedding"], tokens, axis=0)              # (B, L, E)
    _, L, _ = emb.shape
    pooled = []
    for k, w, b in zip(FILTER_SIZES, params["conv_w"], params["conv_b"]):
        T = L - k + 1
        xu = jnp.concatenate([emb[:, i:i + T, :] for i in range(k)], axis=-1)
        s = jax.nn.relu(jnp.einsum("btk,kf->btf", xu, w) + b[None])  # (B, T, F)
        pooled.append(jnp.max(s, axis=1))                            # (B, F)
    feat = jnp.concatenate(pooled, axis=1)                           # (B, 3F)
    return feat @ params["fc_w"] + params["fc_b"]                    # (B, C)


if __name__ == "__main__":
    # Small, deterministic shapes consistent with the module:
    # batch=2, seq_len(padding_size)=32, embedding=64, filter_num=256, classes=8.
    B, L, E = 2, 32, 64
    VOCAB = 128
    FILTER_NUM = 256
    CLASS_LEN = 8

    key = jax.random.PRNGKey(0)
    pkey, dkey = jax.random.split(key)
    params = init_params(pkey, VOCAB, E, FILTER_NUM, CLASS_LEN)
    tokens = jax.random.randint(dkey, (B, L), 0, VOCAB, dtype=jnp.int32)

    kparams = prepare_kernel_params(params, seq_len=L)
    out = cnn_forward(kparams, tokens, class_len=CLASS_LEN)
    out = jax.block_until_ready(out)
    assert out.shape == (B, CLASS_LEN), out.shape

    # Validate against the f32 reference (bf16 matmul operands => loose tolerance).
    ref = cnn_reference(params, tokens)
    if not jnp.allclose(out, ref, rtol=3e-2, atol=3e-2):
        max_err = float(jnp.max(jnp.abs(out - ref)))
        raise AssertionError(f"kernel/reference mismatch, max abs err = {max_err}")
    print("KERNEL_OK")
</pallas_src>

<mosaic_0001>
module attributes {stable_mosaic.version = 11 : i64} {
  func.func @_textcnn_kernel(%arg0: memref<64x1xi32, #tpu.memory_space<vmem>>, %arg1: memref<128x64xbf16, #tpu.memory_space<vmem>>, %arg2: memref<256x768xbf16, #tpu.memory_space<vmem>>, %arg3: memref<1x768xf32, #tpu.memory_space<vmem>>, %arg4: memref<32x768xf32, #tpu.memory_space<vmem>>, %arg5: memref<768x128xbf16, #tpu.memory_space<vmem>>, %arg6: memref<1x128xf32, #tpu.memory_space<vmem>>, %arg7: memref<2x128xf32, #tpu.memory_space<vmem>>) attributes {dimension_semantics = [], scalar_prefetch = 0 : i64, scratch_operands = 0 : i64, tpu.core_type = #tpu.core_type<tc>} {
    %c0 = arith.constant 0 : index
    %c0_0 = arith.constant 0 : index
    %0 = vector.load %arg0[%c0, %c0_0] : memref<64x1xi32, #tpu.memory_space<vmem>>, vector<64x1xi32>
    %1 = tpu.iota {dimensions = array<i32: 1>} : vector<64x128xi32>
    %2 = vector.broadcast %0 : vector<64x1xi32> to vector<64x128xi32>
    %3 = arith.cmpi eq, %2, %1 : vector<64x128xi32>
    %4 = arith.extui %3 : vector<64x128xi1> to vector<64x128xi32>
    %5 = arith.sitofp %4 : vector<64x128xi32> to vector<64x128xf32>
    %6 = arith.truncf %5 : vector<64x128xf32> to vector<64x128xbf16>
    %c0_1 = arith.constant 0 : index
    %c0_2 = arith.constant 0 : index
    %7 = vector.load %arg1[%c0_1, %c0_2] : memref<128x64xbf16, #tpu.memory_space<vmem>>, vector<128x64xbf16>
    %cst = arith.constant dense<0.000000e+00> : vector<64x64xf32>
    %8 = tpu.matmul %6, %7, %cst {dimension_numbers = #tpu.dot_dimension_numbers<[1], [0], [0], [1], [0, 0, 1, 1], [], []>} : vector<64x128xbf16>, vector<128x64xbf16>, vector<64x64xf32> -> vector<64x64xf32>
    %c63_i32 = arith.constant 63 : i32
    %9 = tpu.dynamic_rotate %8 by %c63_i32 dim 0 : vector<64x64xf32>, i32 -> vector<64x64xf32>
    %c62_i32 = arith.constant 62 : i32
    %10 = tpu.dynamic_rotate %8 by %c62_i32 dim 0 : vector<64x64xf32>, i32 -> vector<64x64xf32>
    %c61_i32 = arith.constant 61 : i32
    %11 = tpu.dynamic_rotate %8 by %c61_i32 dim 0 : vector<64x64xf32>, i32 -> vector<64x64xf32>
    %12 = tpu.concatenate %8, %9, %10, %11 in 1 : vector<64x64xf32>, vector<64x64xf32>, vector<64x64xf32>, vector<64x64xf32> -> vector<64x256xf32>
    %13 = arith.truncf %12 : vector<64x256xf32> to vector<64x256xbf16>
    %c0_3 = arith.constant 0 : index
    %c0_4 = arith.constant 0 : index
    %14 = vector.load %arg2[%c0_3, %c0_4] : memref<256x768xbf16, #tpu.memory_space<vmem>>, vector<256x768xbf16>
    %cst_5 = arith.constant dense<0.000000e+00> : vector<64x768xf32>
    %15 = tpu.matmul %13, %14, %cst_5 {dimension_numbers = #tpu.dot_dimension_numbers<[1], [0], [0], [1], [0, 0, 1, 1], [], []>} : vector<64x256xbf16>, vector<256x768xbf16>, vector<64x768xf32> -> vector<64x768xf32>
    %16 = vector.extract_strided_slice %15 {offsets = [0, 0], sizes = [64, 256], strides = [1, 1]} : vector<64x768xf32> to vector<64x256xf32>
    %17 = vector.shape_cast %16 : vector<64x256xf32> to vector<2x32x256xf32>
    %c0_6 = arith.constant 0 : index
    %c0_7 = arith.constant 0 : index
    %18 = vector.load %arg4[%c0_6, %c0_7] : memref<32x768xf32, #tpu.memory_space<vmem>>, vector<32x256xf32>
    %19 = vector.shape_cast %18 : vector<32x256xf32> to vector<1x32x256xf32>
    %20 = vector.broadcast %19 : vector<1x32x256xf32> to vector<2x32x256xf32>
    %21 = arith.addf %17, %20 : vector<2x32x256xf32>
    %cst_8 = arith.constant dense<0xFF800000> : vector<2x256xf32>
    %22 = vector.multi_reduction <maximumf>, %21, %cst_8 [1] : vector<2x32x256xf32> to vector<2x256xf32>
    %23 = vector.extract_strided_slice %15 {offsets = [0, 256], sizes = [64, 256], strides = [1, 1]} : vector<64x768xf32> to vector<64x256xf32>
    %24 = vector.shape_cast %23 : vector<64x256xf32> to vector<2x32x256xf32>
    %c0_9 = arith.constant 0 : index
    %c256 = arith.constant 256 : index
    %25 = vector.load %arg4[%c0_9, %c256] : memref<32x768xf32, #tpu.memory_space<vmem>>, vector<32x256xf32>
    %26 = vector.shape_cast %25 : vector<32x256xf32> to vector<1x32x256xf32>
    %27 = vector.broadcast %26 : vector<1x32x256xf32> to vector<2x32x256xf32>
    %28 = arith.addf %24, %27 : vector<2x32x256xf32>
    %cst_10 = arith.constant dense<0xFF800000> : vector<2x256xf32>
    %29 = vector.multi_reduction <maximumf>, %28, %cst_10 [1] : vector<2x32x256xf32> to vector<2x256xf32>
    %30 = vector.extract_strided_slice %15 {offsets = [0, 512], sizes = [64, 256], strides = [1, 1]} : vector<64x768xf32> to vector<64x256xf32>
    %31 = vector.shape_cast %30 : vector<64x256xf32> to vector<2x32x256xf32>
    %c0_11 = arith.constant 0 : index
    %c512 = arith.constant 512 : index
    %32 = vector.load %arg4[%c0_11, %c512] : memref<32x768xf32, #tpu.memory_space<vmem>>, vector<32x256xf32>
    %33 = vector.shape_cast %32 : vector<32x256xf32> to vector<1x32x256xf32>
    %34 = vector.broadcast %33 : vector<1x32x256xf32> to vector<2x32x256xf32>
    %35 = arith.addf %31, %34 : vector<2x32x256xf32>
    %cst_12 = arith.constant dense<0xFF800000> : vector<2x256xf32>
    %36 = vector.multi_reduction <maximumf>, %35, %cst_12 [1] : vector<2x32x256xf32> to vector<2x256xf32>
    %37 = tpu.concatenate %22, %29, %36 in 1 : vector<2x256xf32>, vector<2x256xf32>, vector<2x256xf32> -> vector<2x768xf32>
    %c0_13 = arith.constant 0 : index
    %c0_14 = arith.constant 0 : index
    %38 = vector.load %arg3[%c0_13, %c0_14] : memref<1x768xf32, #tpu.memory_space<vmem>>, vector<1x768xf32>
    %39 = vector.broadcast %38 : vector<1x768xf32> to vector<2x768xf32>
    %40 = arith.addf %37, %39 : vector<2x768xf32>
    %cst_15 = arith.constant 0.000000e+00 : f32
    %41 = vector.broadcast %cst_15 : f32 to vector<2x768xf32>
    %42 = arith.maximumf %40, %41 : vector<2x768xf32>
    %43 = arith.truncf %42 : vector<2x768xf32> to vector<2x768xbf16>
    %c0_16 = arith.constant 0 : index
    %c0_17 = arith.constant 0 : index
    %44 = vector.load %arg5[%c0_16, %c0_17] : memref<768x128xbf16, #tpu.memory_space<vmem>>, vector<768x128xbf16>
    %cst_18 = arith.constant dense<0.000000e+00> : vector<2x128xf32>
    %45 = tpu.matmul %43, %44, %cst_18 {dimension_numbers = #tpu.dot_dimension_numbers<[1], [0], [0], [1], [0, 0, 1, 1], [], []>} : vector<2x768xbf16>, vector<768x128xbf16>, vector<2x128xf32> -> vector<2x128xf32>
    %c0_19 = arith.constant 0 : index
    %c0_20 = arith.constant 0 : index
    %46 = vector.load %arg6[%c0_19, %c0_20] : memref<1x128xf32, #tpu.memory_space<vmem>>, vector<1x128xf32>
    %47 = vector.broadcast %46 : vector<1x128xf32> to vector<2x128xf32>
    %48 = arith.addf %45, %47 : vector<2x128xf32>
    %c0_21 = arith.constant 0 : index
    %c0_22 = arith.constant 0 : index
    %49 = vector.load %arg7[%c0_21, %c0_22] : memref<2x128xf32, #tpu.memory_space<vmem>>, vector<2x128xf32>
    tpu.vector_store %arg7[%c0_21, %c0_22], %48 {strides = array<i32>} : memref<2x128xf32, #tpu.memory_space<vmem>>, vector<2x128xf32>,
    return
  }
}

</mosaic_0001>

<llo_original>
// kernel: cnn_forward.1
$region0: #{cnn_forward.1}
  #allocation0 [shape = 'u32[]', space=smem, size = 0x4, offset = 0x4, fixed_abs, tag = 'smem constant byte address 0x4 - core index']
  #allocation1 [shape = 'u32[144,128]{1,0:T(1,128)}', space=vmem, size = 0x12000, scoped, tag = 'internal scratch']
  %s0 = inlined_call_operand.vmem [shape: s32[64,1], index: 0, kind: input, shape index: {}]
  %s1 = inlined_call_operand.vmem [shape: bf16[128,64], index: 1, kind: input, shape index: {}]
  %s2 = inlined_call_operand.hbm [shape: bf16[256,768], index: 2, kind: input, shape index: {}]
  %s3 = inlined_call_operand.vmem [shape: f32[1,768], index: 3, kind: input, shape index: {}]
  %s4 = inlined_call_operand.hbm [shape: f32[32,768], index: 4, kind: input, shape index: {}]
  %s5 = inlined_call_operand.hbm [shape: bf16[768,128], index: 5, kind: input, shape index: {}]
  %s6 = inlined_call_operand.vmem [shape: f32[1,128], index: 6, kind: input, shape index: {}]
  %s7 = inlined_call_operand.hbm [shape: f32[2,128], index: 7, kind: output, shape index: {}]
  %s8 = sld [smem:[#allocation0]]
  $region50: #{cnn_forward.1} parent=0
    _
  %s10 = ssub.s32 1, %s8
  %s11 = scalar_select 0, %s10, %s8
  $region1: #{cnn_forward.1} parent=0
    #allocation2 [shape = 'u8[393216]{0}', space=vmem, size = 0x60000, scoped, tag = 'input window, operand 2, single buffered']
    #allocation3 [shape = 's32[1]{0}', space=sflag, size = 0x4, scoped, tag = 'scoped memory for cnn_forward.1']
    #allocation4 [shape = 's32[1]{0}', space=sflag, size = 0x4, scoped, tag = 'scoped memory for cnn_forward.1']
    #allocation5 [shape = 'u8[98304]{0}', space=vmem, size = 0x18000, scoped, tag = 'input window, operand 4, single buffered']
    #allocation6 [shape = 's32[1]{0}', space=sflag, size = 0x4, scoped, tag = 'scoped memory for cnn_forward.1']
    #allocation7 [shape = 'u8[196608]{0}', space=vmem, size = 0x30000, scoped, tag = 'input window, operand 5, single buffered']
    #allocation8 [shape = 'u8[1024]{0}', space=vmem, size = 0x400, scoped, tag = 'output window, operand 0, single buffered']
    %12 = vsyncpa [#allocation3], 0
    %13 = vsyncpa [#allocation6], 0
    %14 = vsyncpa [#allocation4], 0
    // Predicated region
    $region2: #{cnn_forward.1} parent=1 // pred_check
      _
    $region3: #{cnn_forward.1} parent=1 // pred_check_branch
      %16 = sbr.rel (0) target = $region5
    $region4: #{cnn_forward.1} parent=1 // pred_region
      _
    $region5: #{cnn_forward.1} parent=1 // pred_fallthru
      _
    // Predicated region
    $region6: #{cnn_forward.1} parent=1 // pred_check
      _
    $region7: #{cnn_forward.1} parent=1 // pred_check_branch
      %18 = sbr.rel (0) target = $region9
    $region8: #{cnn_forward.1} parent=1 // pred_region
      _
    $region9: #{cnn_forward.1} parent=1 // pred_fallthru
      _
    // Predicated region
    $region10: #{cnn_forward.1} parent=1 // pred_check
      _
    $region11: #{cnn_forward.1} parent=1 // pred_check_branch
      %20 = sbr.rel (0) target = $region13
    $region12: #{cnn_forward.1} parent=1 // pred_region
      %s22 = ssub.s32 12288, 12288
      %23 = vsyncadd [#allocation3], %s22
      %s24 = sshll.u32 [#allocation2], 4
      %s25 = int_to_ptr.vmem [resolvable:$true] %s24
      %30 = dma.hbm_to_vmem [thread:$0]  %s2, 12288, %s25, [#allocation3], 384, 384, 24
    $region13: #{cnn_forward.1} parent=1 // pred_fallthru
      _
    // Predicated region
    $region14: #{cnn_forward.1} parent=1 // pred_check
      _
    $region15: #{cnn_forward.1} parent=1 // pred_check_branch
      %32 = sbr.rel (0) target = $region17
    $region16: #{cnn_forward.1} parent=1 // pred_region
      _
    $region17: #{cnn_forward.1} parent=1 // pred_fallthru
      _
    // Predicated region
    $region18: #{cnn_forward.1} parent=1 // pred_check
      _
    $region19: #{cnn_forward.1} parent=1 // pred_check_branch
      %34 = sbr.rel (0) target = $region21
    $region20: #{cnn_forward.1} parent=1 // pred_region
      %s36 = ssub.s32 3072, 3072
      %37 = vsyncadd [#allocation6], %s36
      %s38 = sshll.u32 [#allocation5], 4
      %s39 = int_to_ptr.vmem [resolvable:$true] %s38
      %44 = dma.hbm_to_vmem [thread:$0]  %s4, 3072, %s39, [#allocation6], 768, 768, 48
    $region21: #{cnn_forward.1} parent=1 // pred_fallthru
      _
    // Predicated region
    $region22: #{cnn_forward.1} parent=1 // pred_check
      _
    $region23: #{cnn_forward.1} parent=1 // pred_check_branch
      %46 = sbr.rel (0) target = $region25
    $region24: #{cnn_forward.1} parent=1 // pred_region
      %s48 = ssub.s32 6144, 6144
      %49 = vsyncadd [#allocation6], %s48
      %s50 = sshll.u32 [#allocation7], 4
      %s51 = int_to_ptr.vmem [resolvable:$true] %s50
      %56 = dma.hbm_to_vmem [thread:$0]  %s5, 6144, %s51, [#allocation6], 64, 64, 4
    $region25: #{cnn_forward.1} parent=1 // pred_fallthru
      _
    // Predicated region
    $region26: #{cnn_forward.1} parent=1 // pred_check
      _
    $region27: #{cnn_forward.1} parent=1 // pred_check_branch
      %58 = sbr.rel (0) target = $region29
    $region28: #{cnn_forward.1} parent=1 // pred_region
      _
    $region29: #{cnn_forward.1} parent=1 // pred_fallthru
      _
    // Predicated region
    $region30: #{cnn_forward.1} parent=1 // pred_check
      _
    $region31: #{cnn_forward.1} parent=1 // pred_check_branch
      %60 = sbr.rel (0) target = $region33
    $region32: #{cnn_forward.1} parent=1 // pred_region
      %61 = dma.done [#allocation3], 12288
    $region33: #{cnn_forward.1} parent=1 // pred_fallthru
      _
    // Predicated region
    $region34: #{cnn_forward.1} parent=1 // pred_check
      _
    $region35: #{cnn_forward.1} parent=1 // pred_check_branch
      %63 = sbr.rel (0) target = $region37
    $region36: #{cnn_forward.1} parent=1 // pred_region
      %64 = dma.done [#allocation6], 3072
    $region37: #{cnn_forward.1} parent=1 // pred_fallthru
      _
    // Predicated region
    $region38: #{cnn_forward.1} parent=1 // pred_check
      _
    $region39: #{cnn_forward.1} parent=1 // pred_check_branch
      %66 = sbr.rel (0) target = $region41
    $region40: #{cnn_forward.1} parent=1 // pred_region
      %67 = dma.done [#allocation6], 6144
    $region41: #{cnn_forward.1} parent=1 // pred_fallthru
      _
    %v69 = vld [vmem:[%s0] sm:$0xff]
    %v70 = vld [vmem:[%s0 + $0x8] sm:$0xff]
    %v71 = vld [vmem:[%s0 + $0x10] sm:$0xff]
    %v72 = vld [vmem:[%s0 + $0x18] sm:$0xff]
    %v73 = vld [vmem:[%s0 + $0x20] sm:$0xff]
    %v74 = vld [vmem:[%s0 + $0x28] sm:$0xff]
    %v75 = vld [vmem:[%s0 + $0x30] sm:$0xff]
    %v76 = vld [vmem:[%s0 + $0x38] sm:$0xff]
    %v77 = vlaneseq
    %v78 = vand.u32 %v77, 127
    %79 = vset.pattern.permute.xlu0 0
    %80 = vperm.xlu0 %79, %v69
    %v81 = vpop.permute.xlu0 %80
    %82 = vset.pattern.permute.xlu0 0
    %83 = vperm.xlu0 %82, %v70
    %v84 = vpop.permute.xlu0 %83
    %85 = vset.pattern.permute.xlu0 0
    %86 = vperm.xlu0 %85, %v71
    %v87 = vpop.permute.xlu0 %86
    %88 = vset.pattern.permute.xlu0 0
    %89 = vperm.xlu0 %88, %v72
    %v90 = vpop.permute.xlu0 %89
    %91 = vset.pattern.permute.xlu0 0
    %92 = vperm.xlu0 %91, %v73
    %v93 = vpop.permute.xlu0 %92
    %94 = vset.pattern.permute.xlu0 0
    %95 = vperm.xlu0 %94, %v74
    %v96 = vpop.permute.xlu0 %95
    %97 = vset.pattern.permute.xlu0 0
    %98 = vperm.xlu0 %97, %v75
    %v99 = vpop.permute.xlu0 %98
    %100 = vset.pattern.permute.xlu0 0
    %101 = vperm.xlu0 %100, %v76
    %v102 = vpop.permute.xlu0 %101
    %vm103 = vcmp.eq.s32.totalorder %v81, %v78
    %vm104 = vcmp.eq.s32.totalorder %v84, %v78
    %vm105 = vcmp.eq.s32.totalorder %v87, %v78
    %vm106 = vcmp.eq.s32.totalorder %v90, %v78
    %vm107 = vcmp.eq.s32.totalorder %v93, %v78
    %vm108 = vcmp.eq.s32.totalorder %v96, %v78
    %vm109 = vcmp.eq.s32.totalorder %v99, %v78
    %vm110 = vcmp.eq.s32.totalorder %v102, %v78
    %v111 = vsel %vm103, 1, 0
    %v112 = vsel %vm104, 1, 0
    %v113 = vsel %vm105, 1, 0
    %v114 = vsel %vm106, 1, 0
    %v115 = vsel %vm107, 1, 0
    %v116 = vsel %vm108, 1, 0
    %v117 = vsel %vm109, 1, 0
    %v118 = vsel %vm110, 1, 0
    %v119 = vcvt.s32.f32 %v111
    %v120 = vcvt.s32.f32 %v112
    %v121 = vcvt.s32.f32 %v113
    %v122 = vcvt.s32.f32 %v114
    %v123 = vcvt.s32.f32 %v115
    %v124 = vcvt.s32.f32 %v116
    %v125 = vcvt.s32.f32 %v117
    %v126 = vcvt.s32.f32 %v118
    %v127 = vpack.c.bf16 %v120, %v119
    %v128 = vpack.c.bf16 %v122, %v121
    %v129 = vpack.c.bf16 %v124, %v123
    %v130 = vpack.c.bf16 %v126, %v125
    %v131 = vld [vmem:[%s1] sm:$0xf]
    %v132 = vld [vmem:[%s1 + $0x4] sm:$0xf]
    %v133 = vld [vmem:[%s1 + $0x8] sm:$0xf]
    %v134 = vld [vmem:[%s1 + $0xc] sm:$0xf]
    %v135 = vld [vmem:[%s1 + $0x10] sm:$0xf]
    %v136 = vld [vmem:[%s1 + $0x14] sm:$0xf]
    %v137 = vld [vmem:[%s1 + $0x18] sm:$0xf]
    %v138 = vld [vmem:[%s1 + $0x1c] sm:$0xf]
    %v139 = vld [vmem:[%s1 + $0x20] sm:$0xf]
    %v140 = vld [vmem:[%s1 + $0x24] sm:$0xf]
    %v141 = vld [vmem:[%s1 + $0x28] sm:$0xf]
    %v142 = vld [vmem:[%s1 + $0x2c] sm:$0xf]
    %v143 = vld [vmem:[%s1 + $0x30] sm:$0xf]
    %v144 = vld [vmem:[%s1 + $0x34] sm:$0xf]
    %v145 = vld [vmem:[%s1 + $0x38] sm:$0xf]
    %v146 = vld [vmem:[%s1 + $0x3c] sm:$0xf]
    %v163 = vunpack.c.l.b16 %v131
    %v164 = vunpack.c.l.b16 %v132
    %v165 = vunpack.c.l.b16 %v133
    %v166 = vunpack.c.l.b16 %v134
    %v167 = vunpack.c.l.b16 %v135
    %v168 = vunpack.c.l.b16 %v136
    %v169 = vunpack.c.l.b16 %v137
    %v170 = vunpack.c.l.b16 %v138
    %v171 = vunpack.c.l.b16 %v139
    %v172 = vunpack.c.l.b16 %v140
    %v173 = vunpack.c.l.b16 %v141
    %v174 = vunpack.c.l.b16 %v142
    %v175 = vunpack.c.l.b16 %v143
    %v176 = vunpack.c.l.b16 %v144
    %v177 = vunpack.c.l.b16 %v145
    %v178 = vunpack.c.l.b16 %v146
    %v179 = vpack.c.b16 %v164, %v163
    %v180 = vpack.c.b16 %v166, %v165
    %v181 = vpack.c.b16 %v168, %v167
    %v182 = vpack.c.b16 %v170, %v169
    %v183 = vpack.c.b16 %v172, %v171
    %v184 = vpack.c.b16 %v174, %v173
    %v185 = vpack.c.b16 %v176, %v175
    %v186 = vpack.c.b16 %v178, %v177
    %195 = vmatprep.subr.bf16.mxu0 0
    %196 = vmatpush1.bf16.msra.mxu0 %v186
    %197 = vmatprep.subr.bf16.mxu0 0
    %198 = vmatpush1.bf16.msra.mxu0 %v185
    %199 = vmatprep.subr.bf16.mxu0 0
    %200 = vmatpush1.bf16.msra.mxu0 %v184
    %201 = vmatprep.subr.bf16.mxu0 0
    %202 = vmatpush1.bf16.msra.mxu0 %v183
    %203 = vmatprep.subr.bf16.mxu0 0
    %204 = vmatpush1.bf16.msra.mxu0 %v182
    %205 = vmatprep.subr.bf16.mxu0 0
    %206 = vmatpush1.bf16.msra.mxu0 %v181
    %207 = vmatprep.subr.bf16.mxu0 0
    %208 = vmatpush1.bf16.msra.mxu0 %v180
    %209 = vmatprep.subr.bf16.mxu0 0
    %210 = vmatpush1.bf16.msra.mxu0 %v179
    %211 = vmatprep.subr.bf16.mxu0 0
    %212 = vmatpush2.bf16.msra.mxu0 0
    %213 = vmatprep.subr.bf16.mxu0 0
    %214 = vmatpush2.bf16.msra.mxu0 0
    %215 = vmatprep.subr.bf16.mxu0 0
    %216 = vmatpush2.bf16.msra.mxu0 0
    %217 = vmatprep.subr.bf16.mxu0 0
    %218 = vmatpush2.bf16.msra.mxu0 0
    %219 = vmatprep.subr.bf16.mxu0 0
    %220 = vmatpush2.bf16.msra.mxu0 0
    %221 = vmatprep.subr.bf16.mxu0 0
    %222 = vmatpush2.bf16.msra.mxu0 0
    %223 = vmatprep.subr.bf16.mxu0 0
    %224 = vmatpush2.bf16.msra.mxu0 0
    %225 = vmatprep.subr.bf16.mxu0 0
    %226 = vmatpush2.bf16.msra.mxu0 0
    %227 = vmatprep.mubr.bf16.mxu0 0
    %228 = vmatmul.mubr.bf16.gmra.mxu0 %v127
    %v229 = vpop.f32.mrf.mxu0
    %v230 = vadd.f32 0.0, %v229
    %v231 = vpop.f32.mrf.mxu0
    %v232 = vpop.f32.mrf.mxu0
    %v233 = vadd.f32 0.0, %v232
    %v234 = vpop.f32.mrf.mxu0
    %235 = vmatprep.mubr.bf16.mxu0 0
    %236 = vmatmul.mubr.bf16.gmra.mxu0 %v128
    %v237 = vpop.f32.mrf.mxu0
    %v238 = vadd.f32 0.0, %v237
    %v239 = vpop.f32.mrf.mxu0
    %v240 = vpop.f32.mrf.mxu0
    %v241 = vadd.f32 0.0, %v240
    %v242 = vpop.f32.mrf.mxu0
    %243 = vmatprep.mubr.bf16.mxu0 0
    %244 = vmatmul.mubr.bf16.gmra.mxu0 %v129
    %v245 = vpop.f32.mrf.mxu0
    %v246 = vadd.f32 0.0, %v245
    %v247 = vpop.f32.mrf.mxu0
    %v248 = vpop.f32.mrf.mxu0
    %v249 = vadd.f32 0.0, %v248
    %v250 = vpop.f32.mrf.mxu0
    %251 = vmatprep.mubr.bf16.mxu0 0
    %252 = vmatmul.mubr.bf16.gmra.mxu0 %v130
    %v253 = vpop.f32.mrf.mxu0
    %v254 = vadd.f32 0.0, %v253
    %v255 = vpop.f32.mrf.mxu0
    %v256 = vpop.f32.mrf.mxu0
    %v257 = vadd.f32 0.0, %v256
    %v258 = vpop.f32.mrf.mxu0
    %259 = vdwg.mxu0
    %v260 = vrot.slane %v230, 1
    %v261 = vrot.slane %v233, 1
    %v262 = vrot.slane %v238, 1
    %v263 = vrot.slane %v241, 1
    %v264 = vrot.slane %v246, 1
    %v265 = vrot.slane %v249, 1
    %v266 = vrot.slane %v254, 1
    %v267 = vrot.slane %v257, 1
    %v268 = vlaneseq
    %v269 = vshrl.u32 %v268, 7
    %vm270 = vcmp.lt.s32.totalorder %v269, 7
    %v271 = vsel %vm270, %v266, %v267
    %v272 = vsel %vm270, %v265, %v266
    %v273 = vsel %vm270, %v264, %v265
    %v274 = vsel %vm270, %v263, %v264
    %v275 = vsel %vm270, %v262, %v263
    %v276 = vsel %vm270, %v261, %v262
    %v277 = vsel %vm270, %v260, %v261
    %v278 = vsel %vm270, %v267, %v260
    %v279 = vrot.slane %v230, 2
    %v280 = vrot.slane %v233, 2
    %v281 = vrot.slane %v238, 2
    %v282 = vrot.slane %v241, 2
    %v283 = vrot.slane %v246, 2
    %v284 = vrot.slane %v249, 2
    %v285 = vrot.slane %v254, 2
    %v286 = vrot.slane %v257, 2
    %vm287 = vcmp.lt.s32.totalorder %v269, 6
    %v288 = vsel %vm287, %v285, %v286
    %v289 = vsel %vm287, %v284, %v285
    %v290 = vsel %vm287, %v283, %v284
    %v291 = vsel %vm287, %v282, %v283
    %v292 = vsel %vm287, %v281, %v282
    %v293 = vsel %vm287, %v280, %v281
    %v294 = vsel %vm287, %v279, %v280
    %v295 = vsel %vm287, %v286, %v279
    %v296 = vrot.slane %v230, 3
    %v297 = vrot.slane %v233, 3
    %v298 = vrot.slane %v238, 3
    %v299 = vrot.slane %v241, 3
    %v300 = vrot.slane %v246, 3
    %v301 = vrot.slane %v249, 3
    %v302 = vrot.slane %v254, 3
    %v303 = vrot.slane %v257, 3
    %vm304 = vcmp.lt.s32.totalorder %v269, 5
    %v305 = vsel %vm304, %v302, %v303
    %v306 = vsel %vm304, %v301, %v302
    %v307 = vsel %vm304, %v300, %v301
    %v308 = vsel %vm304, %v299, %v300
    %v309 = vsel %vm304, %v298, %v299
    %v310 = vsel %vm304, %v297, %v298
    %v311 = vsel %vm304, %v296, %v297
    %v312 = vsel %vm304, %v303, %v296
    %321 = vrot.lane.b32.xlu0 %v277, 64
    %v322 = vpop.permute.xlu0 %321
    %323 = vrot.lane.b32.xlu0 %v276, 64
    %v324 = vpop.permute.xlu0 %323
    %325 = vrot.lane.b32.xlu0 %v275, 64
    %v326 = vpop.permute.xlu0 %325
    %327 = vrot.lane.b32.xlu0 %v274, 64
    %v328 = vpop.permute.xlu0 %327
    %329 = vrot.lane.b32.xlu0 %v273, 64
    %v330 = vpop.permute.xlu0 %329
    %331 = vrot.lane.b32.xlu0 %v272, 64
    %v332 = vpop.permute.xlu0 %331
    %333 = vrot.lane.b32.xlu0 %v271, 64
    %v334 = vpop.permute.xlu0 %333
    %335 = vrot.lane.b32.xlu0 %v278, 64
    %v336 = vpop.permute.xlu0 %335
    %353 = vrot.lane.b32.xlu0 %v311, 64
    %v354 = vpop.permute.xlu0 %353
    %355 = vrot.lane.b32.xlu0 %v310, 64
    %v356 = vpop.permute.xlu0 %355
    %357 = vrot.lane.b32.xlu0 %v309, 64
    %v358 = vpop.permute.xlu0 %357
    %359 = vrot.lane.b32.xlu0 %v308, 64
    %v360 = vpop.permute.xlu0 %359
    %361 = vrot.lane.b32.xlu0 %v307, 64
    %v362 = vpop.permute.xlu0 %361
    %363 = vrot.lane.b32.xlu0 %v306, 64
    %v364 = vpop.permute.xlu0 %363
    %365 = vrot.lane.b32.xlu0 %v305, 64
    %v366 = vpop.permute.xlu0 %365
    %367 = vrot.lane.b32.xlu0 %v312, 64
    %v368 = vpop.permute.xlu0 %367
    %vm377 = vcmask 523264
    %v378 = vsel %vm377, %v230, %v322
    %v379 = vsel %vm377, %v233, %v324
    %v380 = vsel %vm377, %v238, %v326
    %v381 = vsel %vm377, %v241, %v328
    %v382 = vsel %vm377, %v246, %v330
    %v383 = vsel %vm377, %v249, %v332
    %v384 = vsel %vm377, %v254, %v334
    %v385 = vsel %vm377, %v257, %v336
    %v386 = vsel %vm377, %v294, %v354
    %v387 = vsel %vm377, %v293, %v356
    %v388 = vsel %vm377, %v292, %v358
    %v389 = vsel %vm377, %v291, %v360
    %v390 = vsel %vm377, %v290, %v362
    %v391 = vsel %vm377, %v289, %v364
    %v392 = vsel %vm377, %v288, %v366
    %v393 = vsel %vm377, %v295, %v368
    %v394 = vpack.c.bf16 %v379, %v378
    %v395 = vpack.c.bf16 %v387, %v386
    %v396 = vpack.c.bf16 %v381, %v380
    %v397 = vpack.c.bf16 %v389, %v388
    %v398 = vpack.c.bf16 %v383, %v382
    %v399 = vpack.c.bf16 %v391, %v390
    %v400 = vpack.c.bf16 %v385, %v384
    %v401 = vpack.c.bf16 %v393, %v392
    %v402 = vld [vmem:[#allocation2] sm:$0xff]
    %v403 = vld [vmem:[#allocation2 + $0x8] sm:$0xff]
    %v404 = vld [vmem:[#allocation2 + $0x10] sm:$0xff]
    %v405 = vld [vmem:[#allocation2 + $0x18] sm:$0xff]
    %v406 = vld [vmem:[#allocation2 + $0x20] sm:$0xff]
    %v407 = vld [vmem:[#allocation2 + $0x28] sm:$0xff]
    %v408 = vld [vmem:[#allocation2 + $0x30] sm:$0xff]
    %v409 = vld [vmem:[#allocation2 + $0x38] sm:$0xff]
    %v410 = vld [vmem:[#allocation2 + $0x40] sm:$0xff]
    %v411 = vld [vmem:[#allocation2 + $0x48] sm:$0xff]
    %v412 = vld [vmem:[#allocation2 + $0x50] sm:$0xff]
    %v413 = vld [vmem:[#allocation2 + $0x58] sm:$0xff]
    %v414 = vld [vmem:[#allocation2 + $0x60] sm:$0xff]
    %v415 = vld [vmem:[#allocation2 + $0x68] sm:$0xff]
    %v416 = vld [vmem:[#allocation2 + $0x70] sm:$0xff]
    %v417 = vld [vmem:[#allocation2 + $0x78] sm:$0xff]
    %v418 = vld [vmem:[#allocation2 + $0x80] sm:$0xff]
    %v419 = vld [vmem:[#allocation2 + $0x88] sm:$0xff]
    %v420 = vld [vmem:[#allocation2 + $0x90] sm:$0xff]
    %v421 = vld [vmem:[#allocation2 + $0x98] sm:$0xff]
    %v422 = vld [vmem:[#allocation2 + $0xa0] sm:$0xff]
    %v423 = vld [vmem:[#allocation2 + $0xa8] sm:$0xff]
    %v424 = vld [vmem:[#allocation2 + $0xb0] sm:$0xff]
    %v425 = vld [vmem:[#allocation2 + $0xb8] sm:$0xff]
    %v426 = vld [vmem:[#allocation2 + $0xc0] sm:$0xff]
    %v427 = vld [vmem:[#allocation2 + $0xc8] sm:$0xff]
    %v428 = vld [vmem:[#allocation2 + $0xd0] sm:$0xff]
    %v429 = vld [vmem:[#allocation2 + $0xd8] sm:$0xff]
    %v430 = vld [vmem:[#allocation2 + $0xe0] sm:$0xff]
    %v431 = vld [vmem:[#allocation2 + $0xe8] sm:$0xff]
    %v432 = vld [vmem:[#allocation2 + $0xf0] sm:$0xff]
    %v433 = vld [vmem:[#allocation2 + $0xf8] sm:$0xff]
    %v434 = vld [vmem:[#allocation2 + $0x100] sm:$0xff]
    %v435 = vld [vmem:[#allocation2 + $0x108] sm:$0xff]
    %v436 = vld [vmem:[#allocation2 + $0x110] sm:$0xff]
    %v437 = vld [vmem:[#allocation2 + $0x118] sm:$0xff]
    %v438 = vld [vmem:[#allocation2 + $0x120] sm:$0xff]
    %v439 = vld [vmem:[#allocation2 + $0x128] sm:$0xff]
    %v440 = vld [vmem:[#allocation2 + $0x130] sm:$0xff]
    %v441 = vld [vmem:[#allocation2 + $0x138] sm:$0xff]
    %v442 = vld [vmem:[#allocation2 + $0x140] sm:$0xff]
    %v443 = vld [vmem:[#allocation2 + $0x148] sm:$0xff]
    %v444 = vld [vmem:[#allocation2 + $0x150] sm:$0xff]
    %v445 = vld [vmem:[#allocation2 + $0x158] sm:$0xff]
    %v446 = vld [vmem:[#allocation2 + $0x160] sm:$0xff]
    %v447 = vld [vmem:[#allocation2 + $0x168] sm:$0xff]
    %v448 = vld [vmem:[#allocation2 + $0x170] sm:$0xff]
    %v449 = vld [vmem:[#allocation2 + $0x178] sm:$0xff]
    %v450 = vld [vmem:[#allocation2 + $0x180] sm:$0xff]
    %v451 = vld [vmem:[#allocation2 + $0x188] sm:$0xff]
    %v452 = vld [vmem:[#allocation2 + $0x190] sm:$0xff]
    %v453 = vld [vmem:[#allocation2 + $0x198] sm:$0xff]
    %v454 = vld [vmem:[#allocation2 + $0x1a0] sm:$0xff]
    %v455 = vld [vmem:[#allocation2 + $0x1a8] sm:$0xff]
    %v456 = vld [vmem:[#allocation2 + $0x1b0] sm:$0xff]
    %v457 = vld [vmem:[#allocation2 + $0x1b8] sm:$0xff]
    %v458 = vld [vmem:[#allocation2 + $0x1c0] sm:$0xff]
    %v459 = vld [vmem:[#allocation2 + $0x1c8] sm:$0xff]
    %v460 = vld [vmem:[#allocation2 + $0x1d0] sm:$0xff]
    %v461 = vld [vmem:[#allocation2 + $0x1d8] sm:$0xff]
    %v462 = vld [vmem:[#allocation2 + $0x1e0] sm:$0xff]
    %v463 = vld [vmem:[#allocation2 + $0x1e8] sm:$0xff]
    %v464 = vld [vmem:[#allocation2 + $0x1f0] sm:$0xff]
    %v465 = vld [vmem:[#allocation2 + $0x1f8] sm:$0xff]
    %v466 = vld [vmem:[#allocation2 + $0x200] sm:$0xff]
    %v467 = vld [vmem:[#allocation2 + $0x208] sm:$0xff]
    %v468 = vld [vmem:[#allocation2 + $0x210] sm:$0xff]
    %v469 = vld [vmem:[#allocation2 + $0x218] sm:$0xff]
    %v470 = vld [vmem:[#allocation2 + $0x220] sm:$0xff]
    %v471 = vld [vmem:[#allocation2 + $0x228] sm:$0xff]
    %v472 = vld [vmem:[#allocation2 + $0x230] sm:$0xff]
    %v473 = vld [vmem:[#allocation2 + $0x238] sm:$0xff]
    %v474 = vld [vmem:[#allocation2 + $0x240] sm:$0xff]
    %v475 = vld [vmem:[#allocation2 + $0x248] sm:$0xff]
    %v476 = vld [vmem:[#allocation2 + $0x250] sm:$0xff]
    %v477 = vld [vmem:[#allocation2 + $0x258] sm:$0xff]
    %v478 = vld [vmem:[#allocation2 + $0x260] sm:$0xff]
    %v479 = vld [vmem:[#allocation2 + $0x268] sm:$0xff]
    %v480 = vld [vmem:[#allocation2 + $0x270] sm:$0xff]
    %v481 = vld [vmem:[#allocation2 + $0x278] sm:$0xff]
    %v482 = vld [vmem:[#allocation2 + $0x280] sm:$0xff]
    %v483 = vld [vmem:[#allocation2 + $0x288] sm:$0xff]
    %v484 = vld [vmem:[#allocation2 + $0x290] sm:$0xff]
    %v485 = vld [vmem:[#allocation2 + $0x298] sm:$0xff]
    %v486 = vld [vmem:[#allocation2 + $0x2a0] sm:$0xff]
    %v487 = vld [vmem:[#allocation2 + $0x2a8] sm:$0xff]
    %v488 = vld [vmem:[#allocation2 + $0x2b0] sm:$0xff]
    %v489 = vld [vmem:[#allocation2 + $0x2b8] sm:$0xff]
    %v490 = vld [vmem:[#allocation2 + $0x2c0] sm:$0xff]
    %v491 = vld [vmem:[#allocation2 + $0x2c8] sm:$0xff]
    %v492 = vld [vmem:[#allocation2 + $0x2d0] sm:$0xff]
    %v493 = vld [vmem:[#allocation2 + $0x2d8] sm:$0xff]
    %v494 = vld [vmem:[#allocation2 + $0x2e0] sm:$0xff]
    %v495 = vld [vmem:[#allocation2 + $0x2e8] sm:$0xff]
    %v496 = vld [vmem:[#allocation2 + $0x2f0] sm:$0xff]
    %v497 = vld [vmem:[#allocation2 + $0x2f8] sm:$0xff]
    %v594 = vunpack.c.l.b16 %v402
    %v595 = vunpack.c.h.b16 %v402
    %v596 = vunpack.c.l.b16 %v403
    %v597 = vunpack.c.h.b16 %v403
    %v598 = vunpack.c.l.b16 %v404
    %v599 = vunpack.c.h.b16 %v404
    %v600 = vunpack.c.l.b16 %v405
    %v601 = vunpack.c.h.b16 %v405
    %v602 = vunpack.c.l.b16 %v406
    %v603 = vunpack.c.h.b16 %v406
    %v604 = vunpack.c.l.b16 %v407
    %v605 = vunpack.c.h.b16 %v407
    %v606 = vunpack.c.l.b16 %v408
    %v607 = vunpack.c.h.b16 %v408
    %v608 = vunpack.c.l.b16 %v409
    %v609 = vunpack.c.h.b16 %v409
    %v610 = vunpack.c.l.b16 %v410
    %v611 = vunpack.c.h.b16 %v410
    %v612 = vunpack.c.l.b16 %v411
    %v613 = vunpack.c.h.b16 %v411
    %v614 = vunpack.c.l.b16 %v412
    %v615 = vunpack.c.h.b16 %v412
    %v616 = vunpack.c.l.b16 %v413
    %v617 = vunpack.c.h.b16 %v413
    %v618 = vunpack.c.l.b16 %v414
    %v619 = vunpack.c.h.b16 %v414
    %v620 = vunpack.c.l.b16 %v415
    %v621 = vunpack.c.h.b16 %v415
    %v622 = vunpack.c.l.b16 %v416
    %v623 = vunpack.c.h.b16 %v416
    %v624 = vunpack.c.l.b16 %v417
    %v625 = vunpack.c.h.b16 %v417
    %v626 = vunpack.c.l.b16 %v418
    %v627 = vunpack.c.h.b16 %v418
    %v628 = vunpack.c.l.b16 %v419
    %v629 = vunpack.c.h.b16 %v419
    %v630 = vunpack.c.l.b16 %v420
    %v631 = vunpack.c.h.b16 %v420
    %v632 = vunpack.c.l.b16 %v421
    %v633 = vunpack.c.h.b16 %v421
    %v634 = vunpack.c.l.b16 %v422
    %v635 = vunpack.c.h.b16 %v422
    %v636 = vunpack.c.l.b16 %v423
    %v637 = vunpack.c.h.b16 %v423
    %v638 = vunpack.c.l.b16 %v424
    %v639 = vunpack.c.h.b16 %v424
    %v640 = vunpack.c.l.b16 %v425
    %v641 = vunpack.c.h.b16 %v425
    %v642 = vunpack.c.l.b16 %v426
    %v643 = vunpack.c.h.b16 %v426
    %v644 = vunpack.c.l.b16 %v427
    %v645 = vunpack.c.h.b16 %v427
    %v646 = vunpack.c.l.b16 %v428
    %v647 = vunpack.c.h.b16 %v428
    %v648 = vunpack.c.l.b16 %v429
    %v649 = vunpack.c.h.b16 %v429
    %v650 = vunpack.c.l.b16 %v430
    %v651 = vunpack.c.h.b16 %v430
    %v652 = vunpack.c.l.b16 %v431
    %v653 = vunpack.c.h.b16 %v431
    %v654 = vunpack.c.l.b16 %v432
    %v655 = vunpack.c.h.b16 %v432
    %v656 = vunpack.c.l.b16 %v433
    %v657 = vunpack.c.h.b16 %v433
    %v658 = vunpack.c.l.b16 %v434
    %v659 = vunpack.c.h.b16 %v434
    %v660 = vunpack.c.l.b16 %v435
    %v661 = vunpack.c.h.b16 %v435
    %v662 = vunpack.c.l.b16 %v436
    %v663 = vunpack.c.h.b16 %v436
    %v664 = vunpack.c.l.b16 %v437
    %v665 = vunpack.c.h.b16 %v437
    %v666 = vunpack.c.l.b16 %v438
    %v667 = vunpack.c.h.b16 %v438
    %v668 = vunpack.c.l.b16 %v439
    %v669 = vunpack.c.h.b16 %v439
    %v670 = vunpack.c.l.b16 %v440
    %v671 = vunpack.c.h.b16 %v440
    %v672 = vunpack.c.l.b16 %v441
    %v673 = vunpack.c.h.b16 %v441
    %v674 = vunpack.c.l.b16 %v442
    %v675 = vunpack.c.h.b16 %v442
    %v676 = vunpack.c.l.b16 %v443
    %v677 = vunpack.c.h.b16 %v443
    %v678 = vunpack.c.l.b16 %v444
    %v679 = vunpack.c.h.b16 %v444
    %v680 = vunpack.c.l.b16 %v445
    %v681 = vunpack.c.h.b16 %v445
    %v682 = vunpack.c.l.b16 %v446
    %v683 = vunpack.c.h.b16 %v446
    %v684 = vunpack.c.l.b16 %v447
    %v685 = vunpack.c.h.b16 %v447
    %v686 = vunpack.c.l.b16 %v448
    %v687 = vunpack.c.h.b16 %v448
    %v688 = vunpack.c.l.b16 %v449
    %v689 = vunpack.c.h.b16 %v449
    %v690 = vunpack.c.l.b16 %v450
    %v691 = vunpack.c.h.b16 %v450
    %v692 = vunpack.c.l.b16 %v451
    %v693 = vunpack.c.h.b16 %v451
    %v694 = vunpack.c.l.b16 %v452
    %v695 = vunpack.c.h.b16 %v452
    %v696 = vunpack.c.l.b16 %v453
    %v697 = vunpack.c.h.b16 %v453
    %v698 = vunpack.c.l.b16 %v454
    %v699 = vunpack.c.h.b16 %v454
    %v700 = vunpack.c.l.b16 %v455
    %v701 = vunpack.c.h.b16 %v455
    %v702 = vunpack.c.l.b16 %v456
    %v703 = vunpack.c.h.b16 %v456
    %v704 = vunpack.c.l.b16 %v457
    %v705 = vunpack.c.h.b16 %v457
    %v706 = vunpack.c.l.b16 %v458
    %v707 = vunpack.c.h.b16 %v458
    %v708 = vunpack.c.l.b16 %v459
    %v709 = vunpack.c.h.b16 %v459
    %v710 = vunpack.c.l.b16 %v460
    %v711 = vunpack.c.h.b16 %v460
    %v712 = vunpack.c.l.b16 %v461
    %v713 = vunpack.c.h.b16 %v461
    %v714 = vunpack.c.l.b16 %v462
    %v715 = vunpack.c.h.b16 %v462
    %v716 = vunpack.c.l.b16 %v463
    %v717 = vunpack.c.h.b16 %v463
    %v718 = vunpack.c.l.b16 %v464
    %v719 = vunpack.c.h.b16 %v464
    %v720 = vunpack.c.l.b16 %v465
    %v721 = vunpack.c.h.b16 %v465
    %v722 = vunpack.c.l.b16 %v466
    %v723 = vunpack.c.h.b16 %v466
    %v724 = vunpack.c.l.b16 %v467
    %v725 = vunpack.c.h.b16 %v467
    %v726 = vunpack.c.l.b16 %v468
    %v727 = vunpack.c.h.b16 %v468
    %v728 = vunpack.c.l.b16 %v469
    %v729 = vunpack.c.h.b16 %v469
    %v730 = vunpack.c.l.b16 %v470
    %v731 = vunpack.c.h.b16 %v470
    %v732 = vunpack.c.l.b16 %v471
    %v733 = vunpack.c.h.b16 %v471
    %v734 = vunpack.c.l.b16 %v472
    %v735 = vunpack.c.h.b16 %v472
    %v736 = vunpack.c.l.b16 %v473
    %v737 = vunpack.c.h.b16 %v473
    %v738 = vunpack.c.l.b16 %v474
    %v739 = vunpack.c.h.b16 %v474
    %v740 = vunpack.c.l.b16 %v475
    %v741 = vunpack.c.h.b16 %v475
    %v742 = vunpack.c.l.b16 %v476
    %v743 = vunpack.c.h.b16 %v476
    %v744 = vunpack.c.l.b16 %v477
    %v745 = vunpack.c.h.b16 %v477
    %v746 = vunpack.c.l.b16 %v478
    %v747 = vunpack.c.h.b16 %v478
    %v748 = vunpack.c.l.b16 %v479
    %v749 = vunpack.c.h.b16 %v479
    %v750 = vunpack.c.l.b16 %v480
    %v751 = vunpack.c.h.b16 %v480
    %v752 = vunpack.c.l.b16 %v481
    %v753 = vunpack.c.h.b16 %v481
    %v754 = vunpack.c.l.b16 %v482
    %v755 = vunpack.c.h.b16 %v482
    %v756 = vunpack.c.l.b16 %v483
    %v757 = vunpack.c.h.b16 %v483
    %v758 = vunpack.c.l.b16 %v484
    %v759 = vunpack.c.h.b16 %v484
    %v760 = vunpack.c.l.b16 %v485
    %v761 = vunpack.c.h.b16 %v485
    %v762 = vunpack.c.l.b16 %v486
    %v763 = vunpack.c.h.b16 %v486
    %v764 = vunpack.c.l.b16 %v487
    %v765 = vunpack.c.h.b16 %v487
    %v766 = vunpack.c.l.b16 %v488
    %v767 = vunpack.c.h.b16 %v488
    %v768 = vunpack.c.l.b16 %v489
    %v769 = vunpack.c.h.b16 %v489
    %v770 = vunpack.c.l.b16 %v490
    %v771 = vunpack.c.h.b16 %v490
    %v772 = vunpack.c.l.b16 %v491
    %v773 = vunpack.c.h.b16 %v491
    %v774 = vunpack.c.l.b16 %v492
    %v775 = vunpack.c.h.b16 %v492
    %v776 = vunpack.c.l.b16 %v493
    %v777 = vunpack.c.h.b16 %v493
    %v778 = vunpack.c.l.b16 %v494
    %v779 = vunpack.c.h.b16 %v494
    %v780 = vunpack.c.l.b16 %v495
    %v781 = vunpack.c.h.b16 %v495
    %v782 = vunpack.c.l.b16 %v496
    %v783 = vunpack.c.h.b16 %v496
    %v784 = vunpack.c.l.b16 %v497
    %v785 = vunpack.c.h.b16 %v497
    %v786 = vpack.c.b16 %v600, %v594
    %v787 = vpack.c.b16 %v601, %v595
    %v788 = vpack.c.b16 %v602, %v596
    %v789 = vpack.c.b16 %v603, %v597
    %v790 = vpack.c.b16 %v604, %v598
    %v791 = vpack.c.b16 %v605, %v599
    %v792 = vpack.c.b16 %v612, %v606
    %v793 = vpack.c.b16 %v613, %v607
    %v794 = vpack.c.b16 %v614, %v608
    %v795 = vpack.c.b16 %v615, %v609
    %v796 = vpack.c.b16 %v616, %v610
    %v797 = vpack.c.b16 %v617, %v611
    %v798 = vpack.c.b16 %v624, %v618
    %v799 = vpack.c.b16 %v625, %v619
    %v800 = vpack.c.b16 %v626, %v620
    %v801 = vpack.c.b16 %v627, %v621
    %v802 = vpack.c.b16 %v628, %v622
    %v803 = vpack.c.b16 %v629, %v623
    %v804 = vpack.c.b16 %v636, %v630
    %v805 = vpack.c.b16 %v637, %v631
    %v806 = vpack.c.b16 %v638, %v632
    %v807 = vpack.c.b16 %v639, %v633
    %v808 = vpack.c.b16 %v640, %v634
    %v809 = vpack.c.b16 %v641, %v635
    %v810 = vpack.c.b16 %v648, %v642
    %v811 = vpack.c.b16 %v649, %v643
    %v812 = vpack.c.b16 %v650, %v644
    %v813 = vpack.c.b16 %v651, %v645
    %v814 = vpack.c.b16 %v652, %v646
    %v815 = vpack.c.b16 %v653, %v647
    %v816 = vpack.c.b16 %v660, %v654
    %v817 = vpack.c.b16 %v661, %v655
    %v818 = vpack.c.b16 %v662, %v656
    %v819 = vpack.c.b16 %v663, %v657
    %v820 = vpack.c.b16 %v664, %v658
    %v821 = vpack.c.b16 %v665, %v659
    %v822 = vpack.c.b16 %v672, %v666
    %v823 = vpack.c.b16 %v673, %v667
    %v824 = vpack.c.b16 %v674, %v668
    %v825 = vpack.c.b16 %v675, %v669
    %v826 = vpack.c.b16 %v676, %v670
    %v827 = vpack.c.b16 %v677, %v671
    %v828 = vpack.c.b16 %v684, %v678
    %v829 = vpack.c.b16 %v685, %v679
    %v830 = vpack.c.b16 %v686, %v680
    %v831 = vpack.c.b16 %v687, %v681
    %v832 = vpack.c.b16 %v688, %v682
    %v833 = vpack.c.b16 %v689, %v683
    %v834 = vpack.c.b16 %v696, %v690
    %v835 = vpack.c.b16 %v697, %v691
    %v836 = vpack.c.b16 %v698, %v692
    %v837 = vpack.c.b16 %v699, %v693
    %v838 = vpack.c.b16 %v700, %v694
    %v839 = vpack.c.b16 %v701, %v695
    %v840 = vpack.c.b16 %v708, %v702
    %v841 = vpack.c.b16 %v709, %v703
    %v842 = vpack.c.b16 %v710, %v704
    %v843 = vpack.c.b16 %v711, %v705
    %v844 = vpack.c.b16 %v712, %v706
    %v845 = vpack.c.b16 %v713, %v707
    %v846 = vpack.c.b16 %v720, %v714
    %v847 = vpack.c.b16 %v721, %v715
    %v848 = vpack.c.b16 %v722, %v716
    %v849 = vpack.c.b16 %v723, %v717
    %v850 = vpack.c.b16 %v724, %v718
    %v851 = vpack.c.b16 %v725, %v719
    %v852 = vpack.c.b16 %v732, %v726
    %v853 = vpack.c.b16 %v733, %v727
    %v854 = vpack.c.b16 %v734, %v728
    %v855 = vpack.c.b16 %v735, %v729
    %v856 = vpack.c.b16 %v736, %v730
    %v857 = vpack.c.b16 %v737, %v731
    %v858 = vpack.c.b16 %v744, %v738
    %v859 = vpack.c.b16 %v745, %v739
    %v860 = vpack.c.b16 %v746, %v740
    %v861 = vpack.c.b16 %v747, %v741
    %v862 = vpack.c.b16 %v748, %v742
    %v863 = vpack.c.b16 %v749, %v743
    %v864 = vpack.c.b16 %v756, %v750
    %v865 = vpack.c.b16 %v757, %v751
    %v866 = vpack.c.b16 %v758, %v752
    %v867 = vpack.c.b16 %v759, %v753
    %v868 = vpack.c.b16 %v760, %v754
    %v869 = vpack.c.b16 %v761, %v755
    %v870 = vpack.c.b16 %v768, %v762
    %v871 = vpack.c.b16 %v769, %v763
    %v872 = vpack.c.b16 %v770, %v764
    %v873 = vpack.c.b16 %v771, %v765
    %v874 = vpack.c.b16 %v772, %v766
    %v875 = vpack.c.b16 %v773, %v767
    %v876 = vpack.c.b16 %v780, %v774
    %v877 = vpack.c.b16 %v781, %v775
    %v878 = vpack.c.b16 %v782, %v776
    %v879 = vpack.c.b16 %v783, %v777
    %v880 = vpack.c.b16 %v784, %v778
    %v881 = vpack.c.b16 %v785, %v779
    %978 = vmatprep.subr.bf16.mxu0 %v829
    %979 = vmatpush1.bf16.msra.mxu0 %v828
    %980 = vmatprep.subr.bf16.mxu0 %v823
    %981 = vmatpush1.bf16.msra.mxu0 %v822
    %982 = vmatprep.subr.bf16.mxu0 %v817
    %983 = vmatpush1.bf16.msra.mxu0 %v816
    %984 = vmatprep.subr.bf16.mxu0 %v811
    %985 = vmatpush1.bf16.msra.mxu0 %v810
    %986 = vmatprep.subr.bf16.mxu0 %v805
    %987 = vmatpush1.bf16.msra.mxu0 %v804
    %988 = vmatprep.subr.bf16.mxu0 %v799
    %989 = vmatpush1.bf16.msra.mxu0 %v798
    %990 = vmatprep.subr.bf16.mxu0 %v793
    %991 = vmatpush1.bf16.msra.mxu0 %v792
    %992 = vmatprep.subr.bf16.mxu0 %v787
    %993 = vmatpush1.bf16.msra.mxu0 %v786
    %994 = vmatprep.subr.bf16.mxu0 %v877
    %995 = vmatpush2.bf16.msra.mxu0 %v876
    %996 = vmatprep.subr.bf16.mxu0 %v871
    %997 = vmatpush2.bf16.msra.mxu0 %v870
    %998 = vmatprep.subr.bf16.mxu0 %v865
    %999 = vmatpush2.bf16.msra.mxu0 %v864
    %1000 = vmatprep.subr.bf16.mxu0 %v859
    %1001 = vmatpush2.bf16.msra.mxu0 %v858
    %1002 = vmatprep.subr.bf16.mxu0 %v853
    %1003 = vmatpush2.bf16.msra.mxu0 %v852
    %1004 = vmatprep.subr.bf16.mxu0 %v847
    %1005 = vmatpush2.bf16.msra.mxu0 %v846
    %1006 = vmatprep.subr.bf16.mxu0 %v841
    %1007 = vmatpush2.bf16.msra.mxu0 %v840
    %1008 = vmatprep.subr.bf16.mxu0 %v835
    %1009 = vmatpush2.bf16.msra.mxu0 %v834
    %1010 = vmatprep.mubr.bf16.mxu0 %v395
    %1011 = vmatmul.mubr.bf16.gmra.mxu0 %v394
    %v1012 = vpop.f32.mrf.mxu0
    %v1013 = vadd.f32 0.0, %v1012
    %v1014 = vpop.f32.mrf.mxu0
    %v1015 = vadd.f32 0.0, %v1014
    %v1016 = vpop.f32.mrf.mxu0
    %v1017 = vadd.f32 0.0, %v1016
    %v1018 = vpop.f32.mrf.mxu0
    %v1019 = vadd.f32 0.0, %v1018
    %1020 = vmatprep.mubr.bf16.mxu0 %v397
    %1021 = vmatmul.mubr.bf16.gmra.mxu0 %v396
    %v1022 = vpop.f32.mrf.mxu0
    %v1023 = vadd.f32 0.0, %v1022
    %v1024 = vpop.f32.mrf.mxu0
    %v1025 = vadd.f32 0.0, %v1024
    %v1026 = vpop.f32.mrf.mxu0
    %v1027 = vadd.f32 0.0, %v1026
    %v1028 = vpop.f32.mrf.mxu0
    %v1029 = vadd.f32 0.0, %v1028
    %1030 = vmatprep.mubr.bf16.mxu0 %v399
    %1031 = vmatmul.mubr.bf16.gmra.mxu0 %v398
    %v1032 = vpop.f32.mrf.mxu0
    %v1033 = vadd.f32 0.0, %v1032
    %v1034 = vpop.f32.mrf.mxu0
    %v1035 = vadd.f32 0.0, %v1034
    %v1036 = vpop.f32.mrf.mxu0
    %v1037 = vadd.f32 0.0, %v1036
    %v1038 = vpop.f32.mrf.mxu0
    %v1039 = vadd.f32 0.0, %v1038
    %1040 = vmatprep.mubr.bf16.mxu0 %v401
    %1041 = vmatmul.mubr.bf16.gmra.mxu0 %v400
    %v1042 = vpop.f32.mrf.mxu0
    %v1043 = vadd.f32 0.0, %v1042
    %v1044 = vpop.f32.mrf.mxu0
    %v1045 = vadd.f32 0.0, %v1044
    %v1046 = vpop.f32.mrf.mxu0
    %v1047 = vadd.f32 0.0, %v1046
    %v1048 = vpop.f32.mrf.mxu0
    %v1049 = vadd.f32 0.0, %v1048
    %1050 = vdwg.mxu0
    %1051 = vmatprep.subr.bf16.mxu0 %v831
    %1052 = vmatpush1.bf16.msra.mxu0 %v830
    %1053 = vmatprep.subr.bf16.mxu0 %v825
    %1054 = vmatpush1.bf16.msra.mxu0 %v824
    %1055 = vmatprep.subr.bf16.mxu0 %v819
    %1056 = vmatpush1.bf16.msra.mxu0 %v818
    %1057 = vmatprep.subr.bf16.mxu0 %v813
    %1058 = vmatpush1.bf16.msra.mxu0 %v812
    %1059 = vmatprep.subr.bf16.mxu0 %v807
    %1060 = vmatpush1.bf16.msra.mxu0 %v806
    %1061 = vmatprep.subr.bf16.mxu0 %v801
    %1062 = vmatpush1.bf16.msra.mxu0 %v800
    %1063 = vmatprep.subr.bf16.mxu0 %v795
    %1064 = vmatpush1.bf16.msra.mxu0 %v794
    %1065 = vmatprep.subr.bf16.mxu0 %v789
    %1066 = vmatpush1.bf16.msra.mxu0 %v788
    %1067 = vmatprep.subr.bf16.mxu0 %v879
    %1068 = vmatpush2.bf16.msra.mxu0 %v878
    %1069 = vmatprep.subr.bf16.mxu0 %v873
    %1070 = vmatpush2.bf16.msra.mxu0 %v872
    %1071 = vmatprep.subr.bf16.mxu0 %v867
    %1072 = vmatpush2.bf16.msra.mxu0 %v866
    %1073 = vmatprep.subr.bf16.mxu0 %v861
    %1074 = vmatpush2.bf16.msra.mxu0 %v860
    %1075 = vmatprep.subr.bf16.mxu0 %v855
    %1076 = vmatpush2.bf16.msra.mxu0 %v854
    %1077 = vmatprep.subr.bf16.mxu0 %v849
    %1078 = vmatpush2.bf16.msra.mxu0 %v848
    %1079 = vmatprep.subr.bf16.mxu0 %v843
    %1080 = vmatpush2.bf16.msra.mxu0 %v842
    %1081 = vmatprep.subr.bf16.mxu0 %v837
    %1082 = vmatpush2.bf16.msra.mxu0 %v836
    %1083 = vmatprep.mubr.bf16.mxu0 %v395
    %1084 = vmatmul.mubr.bf16.gmra.mxu0 %v394
    %v1085 = vpop.f32.mrf.mxu0
    %v1086 = vadd.f32 0.0, %v1085
    %v1087 = vpop.f32.mrf.mxu0
    %v1088 = vadd.f32 0.0, %v1087
    %v1089 = vpop.f32.mrf.mxu0
    %v1090 = vadd.f32 0.0, %v1089
    %v1091 = vpop.f32.mrf.mxu0
    %v1092 = vadd.f32 0.0, %v1091
    %1093 = vmatprep.mubr.bf16.mxu0 %v397
    %1094 = vmatmul.mubr.bf16.gmra.mxu0 %v396
    %v1095 = vpop.f32.mrf.mxu0
    %v1096 = vadd.f32 0.0, %v1095
    %v1097 = vpop.f32.mrf.mxu0
    %v1098 = vadd.f32 0.0, %v1097
    %v1099 = vpop.f32.mrf.mxu0
    %v1100 = vadd.f32 0.0, %v1099
    %v1101 = vpop.f32.mrf.mxu0
    %v1102 = vadd.f32 0.0, %v1101
    %1103 = vmatprep.mubr.bf16.mxu0 %v399
    %1104 = vmatmul.mubr.bf16.gmra.mxu0 %v398
    %v1105 = vpop.f32.mrf.mxu0
    %v1106 = vadd.f32 0.0, %v1105
    %v1107 = vpop.f32.mrf.mxu0
    %v1108 = vadd.f32 0.0, %v1107
    %v1109 = vpop.f32.mrf.mxu0
    %v1110 = vadd.f32 0.0, %v1109
    %v1111 = vpop.f32.mrf.mxu0
    %v1112 = vadd.f32 0.0, %v1111
    %1113 = vmatprep.mubr.bf16.mxu0 %v401
    %1114 = vmatmul.mubr.bf16.gmra.mxu0 %v400
    %v1115 = vpop.f32.mrf.mxu0
    %v1116 = vadd.f32 0.0, %v1115
    %v1117 = vpop.f32.mrf.mxu0
    %v1118 = vadd.f32 0.0, %v1117
    %v1119 = vpop.f32.mrf.mxu0
    %v1120 = vadd.f32 0.0, %v1119
    %v1121 = vpop.f32.mrf.mxu0
    %v1122 = vadd.f32 0.0, %v1121
    %1123 = vdwg.mxu0
    %1124 = vmatprep.subr.bf16.mxu0 %v833
    %1125 = vmatpush1.bf16.msra.mxu0 %v832
    %1126 = vmatprep.subr.bf16.mxu0 %v827
    %1127 = vmatpush1.bf16.msra.mxu0 %v826
    %1128 = vmatprep.subr.bf16.mxu0 %v821
    %1129 = vmatpush1.bf16.msra.mxu0 %v820
    %1130 = vmatprep.subr.bf16.mxu0 %v815
    %1131 = vmatpush1.bf16.msra.mxu0 %v814
    %1132 = vmatprep.subr.bf16.mxu0 %v809
    %1133 = vmatpush1.bf16.msra.mxu0 %v808
    %1134 = vmatprep.subr.bf16.mxu0 %v803
    %1135 = vmatpush1.bf16.msra.mxu0 %v802
    %1136 = vmatprep.subr.bf16.mxu0 %v797
    %1137 = vmatpush1.bf16.msra.mxu0 %v796
    %1138 = vmatprep.subr.bf16.mxu0 %v791
    %1139 = vmatpush1.bf16.msra.mxu0 %v790
    %1140 = vmatprep.subr.bf16.mxu0 %v881
    %1141 = vmatpush2.bf16.msra.mxu0 %v880
    %1142 = vmatprep.subr.bf16.mxu0 %v875
    %1143 = vmatpush2.bf16.msra.mxu0 %v874
    %1144 = vmatprep.subr.bf16.mxu0 %v869
    %1145 = vmatpush2.bf16.msra.mxu0 %v868
    %1146 = vmatprep.subr.bf16.mxu0 %v863
    %1147 = vmatpush2.bf16.msra.mxu0 %v862
    %1148 = vmatprep.subr.bf16.mxu0 %v857
    %1149 = vmatpush2.bf16.msra.mxu0 %v856
    %1150 = vmatprep.subr.bf16.mxu0 %v851
    %1151 = vmatpush2.bf16.msra.mxu0 %v850
    %1152 = vmatprep.subr.bf16.mxu0 %v845
    %1153 = vmatpush2.bf16.msra.mxu0 %v844
    %1154 = vmatprep.subr.bf16.mxu0 %v839
    %1155 = vmatpush2.bf16.msra.mxu0 %v838
    %1156 = vmatprep.mubr.bf16.mxu0 %v395
    %1157 = vmatmul.mubr.bf16.gmra.mxu0 %v394
    %v1158 = vpop.f32.mrf.mxu0
    %v1159 = vadd.f32 0.0, %v1158
    %v1160 = vpop.f32.mrf.mxu0
    %v1161 = vadd.f32 0.0, %v1160
    %v1162 = vpop.f32.mrf.mxu0
    %v1163 = vadd.f32 0.0, %v1162
    %v1164 = vpop.f32.mrf.mxu0
    %v1165 = vadd.f32 0.0, %v1164
    %1166 = vmatprep.mubr.bf16.mxu0 %v397
    %1167 = vmatmul.mubr.bf16.gmra.mxu0 %v396
    %v1168 = vpop.f32.mrf.mxu0
    %v1169 = vadd.f32 0.0, %v1168
    %v1170 = vpop.f32.mrf.mxu0
    %v1171 = vadd.f32 0.0, %v1170
    %v1172 = vpop.f32.mrf.mxu0
    %v1173 = vadd.f32 0.0, %v1172
    %v1174 = vpop.f32.mrf.mxu0
    %v1175 = vadd.f32 0.0, %v1174
    %1176 = vmatprep.mubr.bf16.mxu0 %v399
    %1177 = vmatmul.mubr.bf16.gmra.mxu0 %v398
    %v1178 = vpop.f32.mrf.mxu0
    %v1179 = vadd.f32 0.0, %v1178
    %v1180 = vpop.f32.mrf.mxu0
    %v1181 = vadd.f32 0.0, %v1180
    %v1182 = vpop.f32.mrf.mxu0
    %v1183 = vadd.f32 0.0, %v1182
    %v1184 = vpop.f32.mrf.mxu0
    %v1185 = vadd.f32 0.0, %v1184
    %1186 = vmatprep.mubr.bf16.mxu0 %v401
    %1187 = vmatmul.mubr.bf16.gmra.mxu0 %v400
    %v1188 = vpop.f32.mrf.mxu0
    %v1189 = vadd.f32 0.0, %v1188
    %v1190 = vpop.f32.mrf.mxu0
    %v1191 = vadd.f32 0.0, %v1190
    %v1192 = vpop.f32.mrf.mxu0
    %v1193 = vadd.f32 0.0, %v1192
    %v1194 = vpop.f32.mrf.mxu0
    %v1195 = vadd.f32 0.0, %v1194
    %1196 = vdwg.mxu0
    %v1197 = vld [vmem:[#allocation5] sm:$0xff]
    %v1198 = vld [vmem:[#allocation5 + $0x8] sm:$0xff]
    %v1199 = vld [vmem:[#allocation5 + $0x30] sm:$0xff]
    %v1200 = vld [vmem:[#allocation5 + $0x38] sm:$0xff]
    %v1201 = vld [vmem:[#allocation5 + $0x60] sm:$0xff]
    %v1202 = vld [vmem:[#allocation5 + $0x68] sm:$0xff]
    %v1203 = vld [vmem:[#allocation5 + $0x90] sm:$0xff]
    %v1204 = vld [vmem:[#allocation5 + $0x98] sm:$0xff]
    %v1205 = vadd.f32 %v1013, %v1197
    %v1206 = vadd.f32 %v1015, %v1198
    %v1207 = vadd.f32 %v1017, %v1199
    %v1208 = vadd.f32 %v1019, %v1200
    %v1209 = vadd.f32 %v1023, %v1201
    %v1210 = vadd.f32 %v1025, %v1202
    %v1211 = vadd.f32 %v1027, %v1203
    %v1212 = vadd.f32 %v1029, %v1204
    %v1213 = vadd.f32 %v1033, %v1197
    %v1214 = vadd.f32 %v1035, %v1198
    %v1215 = vadd.f32 %v1037, %v1199
    %v1216 = vadd.f32 %v1039, %v1200
    %v1217 = vadd.f32 %v1043, %v1201
    %v1218 = vadd.f32 %v1045, %v1202
    %v1219 = vadd.f32 %v1047, %v1203
    %v1220 = vadd.f32 %v1049, %v1204
    %v1221 = vmax.f32 %v1205, %v1207
    %v1222 = vmax.f32 %v1221, %v1209
    %v1223 = vmax.f32 %v1222, %v1211
    %v1224 = vrot.slane %v1223, 4
    %v1225 = vmax.f32 %v1223, %v1224
    %v1226 = vrot.slane %v1225, 2
    %v1227 = vmax.f32 %v1225, %v1226
    %v1228 = vrot.slane %v1227, 1
    %v1229 = vmax.f32 %v1227, %v1228
    %v1230 = vmax.f32 %v1206, %v1208
    %v1231 = vmax.f32 %v1230, %v1210
    %v1232 = vmax.f32 %v1231, %v1212
    %v1233 = vrot.slane %v1232, 4
    %v1234 = vmax.f32 %v1232, %v1233
    %v1235 = vrot.slane %v1234, 2
    %v1236 = vmax.f32 %v1234, %v1235
    %v1237 = vrot.slane %v1236, 1
    %v1238 = vmax.f32 %v1236, %v1237
    %v1239 = vmax.f32 %v1213, %v1215
    %v1240 = vmax.f32 %v1239, %v1217
    %v1241 = vmax.f32 %v1240, %v1219
    %v1242 = vrot.slane %v1241, 4
    %v1243 = vmax.f32 %v1241, %v1242
    %v1244 = vrot.slane %v1243, 2
    %v1245 = vmax.f32 %v1243, %v1244
    %v1246 = vrot.slane %v1245, 1
    %v1247 = vmax.f32 %v1245, %v1246
    %v1248 = vmax.f32 %v1214, %v1216
    %v1249 = vmax.f32 %v1248, %v1218
    %v1250 = vmax.f32 %v1249, %v1220
    %v1251 = vrot.slane %v1250, 4
    %v1252 = vmax.f32 %v1250, %v1251
    %v1253 = vrot.slane %v1252, 2
    %v1254 = vmax.f32 %v1252, %v1253
    %v1255 = vrot.slane %v1254, 1
    %v1256 = vmax.f32 %v1254, %v1255
    %v1257 = vld [vmem:[#allocation5 + $0x10] sm:$0xff]
    %v1258 = vld [vmem:[#allocation5 + $0x18] sm:$0xff]
    %v1259 = vld [vmem:[#allocation5 + $0x40] sm:$0xff]
    %v1260 = vld [vmem:[#allocation5 + $0x48] sm:$0xff]
    %v1261 = vld [vmem:[#allocation5 + $0x70] sm:$0xff]
    %v1262 = vld [vmem:[#allocation5 + $0x78] sm:$0xff]
    %v1263 = vld [vmem:[#allocation5 + $0xa0] sm:$0xff]
    %v1264 = vld [vmem:[#allocation5 + $0xa8] sm:$0xff]
    %v1265 = vadd.f32 %v1086, %v1257
    %v1266 = vadd.f32 %v1088, %v1258
    %v1267 = vadd.f32 %v1090, %v1259
    %v1268 = vadd.f32 %v1092, %v1260
    %v1269 = vadd.f32 %v1096, %v1261
    %v1270 = vadd.f32 %v1098, %v1262
    %v1271 = vadd.f32 %v1100, %v1263
    %v1272 = vadd.f32 %v1102, %v1264
    %v1273 = vadd.f32 %v1106, %v1257
    %v1274 = vadd.f32 %v1108, %v1258
    %v1275 = vadd.f32 %v1110, %v1259
    %v1276 = vadd.f32 %v1112, %v1260
    %v1277 = vadd.f32 %v1116, %v1261
    %v1278 = vadd.f32 %v1118, %v1262
    %v1279 = vadd.f32 %v1120, %v1263
    %v1280 = vadd.f32 %v1122, %v1264
    %v1281 = vmax.f32 %v1265, %v1267
    %v1282 = vmax.f32 %v1281, %v1269
    %v1283 = vmax.f32 %v1282, %v1271
    %v1284 = vrot.slane %v1283, 4
    %v1285 = vmax.f32 %v1283, %v1284
    %v1286 = vrot.slane %v1285, 2
    %v1287 = vmax.f32 %v1285, %v1286
    %v1288 = vrot.slane %v1287, 1
    %v1289 = vmax.f32 %v1287, %v1288
    %v1290 = vmax.f32 %v1266, %v1268
    %v1291 = vmax.f32 %v1290, %v1270
    %v1292 = vmax.f32 %v1291, %v1272
    %v1293 = vrot.slane %v1292, 4
    %v1294 = vmax.f32 %v1292, %v1293
    %v1295 = vrot.slane %v1294, 2
    %v1296 = vmax.f32 %v1294, %v1295
    %v1297 = vrot.slane %v1296, 1
    %v1298 = vmax.f32 %v1296, %v1297
    %v1299 = vmax.f32 %v1273, %v1275
    %v1300 = vmax.f32 %v1299, %v1277
    %v1301 = vmax.f32 %v1300, %v1279
    %v1302 = vrot.slane %v1301, 4
    %v1303 = vmax.f32 %v1301, %v1302
    %v1304 = vrot.slane %v1303, 2
    %v1305 = vmax.f32 %v1303, %v1304
    %v1306 = vrot.slane %v1305, 1
    %v1307 = vmax.f32 %v1305, %v1306
    %v1308 = vmax.f32 %v1274, %v1276
    %v1309 = vmax.f32 %v1308, %v1278
    %v1310 = vmax.f32 %v1309, %v1280
    %v1311 = vrot.slane %v1310, 4
    %v1312 = vmax.f32 %v1310, %v1311
    %v1313 = vrot.slane %v1312, 2
    %v1314 = vmax.f32 %v1312, %v1313
    %v1315 = vrot.slane %v1314, 1
    %v1316 = vmax.f32 %v1314, %v1315
    %v1317 = vld [vmem:[#allocation5 + $0x20] sm:$0xff]
    %v1318 = vld [vmem:[#allocation5 + $0x28] sm:$0xff]
    %v1319 = vld [vmem:[#allocation5 + $0x50] sm:$0xff]
    %v1320 = vld [vmem:[#allocation5 + $0x58] sm:$0xff]
    %v1321 = vld [vmem:[#allocation5 + $0x80] sm:$0xff]
    %v1322 = vld [vmem:[#allocation5 + $0x88] sm:$0xff]
    %v1323 = vld [vmem:[#allocation5 + $0xb0] sm:$0xff]
    %v1324 = vld [vmem:[#allocation5 + $0xb8] sm:$0xff]
    %v1325 = vadd.f32 %v1159, %v1317
    %v1326 = vadd.f32 %v1161, %v1318
    %v1327 = vadd.f32 %v1163, %v1319
    %v1328 = vadd.f32 %v1165, %v1320
    %v1329 = vadd.f32 %v1169, %v1321
    %v1330 = vadd.f32 %v1171, %v1322
    %v1331 = vadd.f32 %v1173, %v1323
    %v1332 = vadd.f32 %v1175, %v1324
    %v1333 = vadd.f32 %v1179, %v1317
    %v1334 = vadd.f32 %v1181, %v1318
    %v1335 = vadd.f32 %v1183, %v1319
    %v1336 = vadd.f32 %v1185, %v1320
    %v1337 = vadd.f32 %v1189, %v1321
    %v1338 = vadd.f32 %v1191, %v1322
    %v1339 = vadd.f32 %v1193, %v1323
    %v1340 = vadd.f32 %v1195, %v1324
    %v1341 = vmax.f32 %v1325, %v1327
    %v1342 = vmax.f32 %v1341, %v1329
    %v1343 = vmax.f32 %v1342, %v1331
    %v1344 = vrot.slane %v1343, 4
    %v1345 = vmax.f32 %v1343, %v1344
    %v1346 = vrot.slane %v1345, 2
    %v1347 = vmax.f32 %v1345, %v1346
    %v1348 = vrot.slane %v1347, 1
    %v1349 = vmax.f32 %v1347, %v1348
    %v1350 = vmax.f32 %v1326, %v1328
    %v1351 = vmax.f32 %v1350, %v1330
    %v1352 = vmax.f32 %v1351, %v1332
    %v1353 = vrot.slane %v1352, 4
    %v1354 = vmax.f32 %v1352, %v1353
    %v1355 = vrot.slane %v1354, 2
    %v1356 = vmax.f32 %v1354, %v1355
    %v1357 = vrot.slane %v1356, 1
    %v1358 = vmax.f32 %v1356, %v1357
    %v1359 = vmax.f32 %v1333, %v1335
    %v1360 = vmax.f32 %v1359, %v1337
    %v1361 = vmax.f32 %v1360, %v1339
    %v1362 = vrot.slane %v1361, 4
    %v1363 = vmax.f32 %v1361, %v1362
    %v1364 = vrot.slane %v1363, 2
    %v1365 = vmax.f32 %v1363, %v1364
    %v1366 = vrot.slane %v1365, 1
    %v1367 = vmax.f32 %v1365, %v1366
    %v1368 = vmax.f32 %v1334, %v1336
    %v1369 = vmax.f32 %v1368, %v1338
    %v1370 = vmax.f32 %v1369, %v1340
    %v1371 = vrot.slane %v1370, 4
    %v1372 = vmax.f32 %v1370, %v1371
    %v1373 = vrot.slane %v1372, 2
    %v1374 = vmax.f32 %v1372, %v1373
    %v1375 = vrot.slane %v1374, 1
    %v1376 = vmax.f32 %v1374, %v1375
    %vm1381 = vcmask 1041409
    %v1382 = vsel %vm1381, %v1247, %v1229
    %v1383 = vsel %vm1381, %v1256, %v1238
    %v1390 = vsel %vm1381, %v1307, %v1289
    %v1391 = vsel %vm1381, %v1316, %v1298
    %v1398 = vsel %vm1381, %v1367, %v1349
    %v1399 = vsel %vm1381, %v1376, %v1358
    %v1402 = vld [vmem:[%s3] sm:$0x3f]
    %v1404 = vlaneseq
    %v1405 = vshrl.u32 %v1404, 7
    %v1406 = vsub.s32 0, %v1405
    %v1407 = vrot.slane %v1402, %v1406
    %v1408 = vlaneseq
    %v1409 = vshrl.u32 %v1408, 7
    %v1410 = vsub.s32 1, %v1409
    %v1411 = vrot.slane %v1402, %v1410
    %v1412 = vlaneseq
    %v1413 = vshrl.u32 %v1412, 7
    %v1414 = vsub.s32 2, %v1413
    %v1415 = vrot.slane %v1402, %v1414
    %v1416 = vlaneseq
    %v1417 = vshrl.u32 %v1416, 7
    %v1418 = vsub.s32 3, %v1417
    %v1419 = vrot.slane %v1402, %v1418
    %v1420 = vlaneseq
    %v1421 = vshrl.u32 %v1420, 7
    %v1422 = vsub.s32 4, %v1421
    %v1423 = vrot.slane %v1402, %v1422
    %v1424 = vlaneseq
    %v1425 = vshrl.u32 %v1424, 7
    %v1426 = vsub.s32 5, %v1425
    %v1427 = vrot.slane %v1402, %v1426
    %v1434 = vadd.f32 %v1382, %v1407
    %v1435 = vadd.f32 %v1383, %v1411
    %v1436 = vadd.f32 %v1390, %v1415
    %v1437 = vadd.f32 %v1391, %v1419
    %v1438 = vadd.f32 %v1398, %v1423
    %v1439 = vadd.f32 %v1399, %v1427
    %v1440 = vmax.f32 %v1434, 0.0
    %v1441 = vmax.f32 %v1435, 0.0
    %v1442 = vmax.f32 %v1436, 0.0
    %v1443 = vmax.f32 %v1437, 0.0
    %v1444 = vmax.f32 %v1438, 0.0
    %v1445 = vmax.f32 %v1439, 0.0
    %v1446 = vpack.c.bf16 %v1440, %v1440
    %v1447 = vpack.c.bf16 %v1441, %v1441
    %v1448 = vpack.c.bf16 %v1442, %v1442
    %v1449 = vpack.c.bf16 %v1443, %v1443
    %v1450 = vpack.c.bf16 %v1444, %v1444
    %v1451 = vpack.c.bf16 %v1445, %v1445
    %v1452 = vld [vmem:[#allocation7] sm:$0xf]
    %v1453 = vld [vmem:[#allocation7 + $0x4] sm:$0xf]
    %v1454 = vld [vmem:[#allocation7 + $0x8] sm:$0xf]
    %v1455 = vld [vmem:[#allocation7 + $0xc] sm:$0xf]
    %v1456 = vld [vmem:[#allocation7 + $0x10] sm:$0xf]
    %v1457 = vld [vmem:[#allocation7 + $0x14] sm:$0xf]
    %v1458 = vld [vmem:[#allocation7 + $0x18] sm:$0xf]
    %v1459 = vld [vmem:[#allocation7 + $0x1c] sm:$0xf]
    %v1460 = vld [vmem:[#allocation7 + $0x20] sm:$0xf]
    %v1461 = vld [vmem:[#allocation7 + $0x24] sm:$0xf]
    %v1462 = vld [vmem:[#allocation7 + $0x28] sm:$0xf]
    %v1463 = vld [vmem:[#allocation7 + $0x2c] sm:$0xf]
    %v1464 = vld [vmem:[#allocation7 + $0x30] sm:$0xf]
    %v1465 = vld [vmem:[#allocation7 + $0x34] sm:$0xf]
    %v1466 = vld [vmem:[#allocation7 + $0x38] sm:$0xf]
    %v1467 = vld [vmem:[#allocation7 + $0x3c] sm:$0xf]
    %v1468 = vld [vmem:[#allocation7 + $0x40] sm:$0xf]
    %v1469 = vld [vmem:[#allocation7 + $0x44] sm:$0xf]
    %v1470 = vld [vmem:[#allocation7 + $0x48] sm:$0xf]
    %v1471 = vld [vmem:[#allocation7 + $0x4c] sm:$0xf]
    %v1472 = vld [vmem:[#allocation7 + $0x50] sm:$0xf]
    %v1473 = vld [vmem:[#allocation7 + $0x54] sm:$0xf]
    %v1474 = vld [vmem:[#allocation7 + $0x58] sm:$0xf]
    %v1475 = vld [vmem:[#allocation7 + $0x5c] sm:$0xf]
    %v1476 = vld [vmem:[#allocation7 + $0x60] sm:$0xf]
    %v1477 = vld [vmem:[#allocation7 + $0x64] sm:$0xf]
    %v1478 = vld [vmem:[#allocation7 + $0x68] sm:$0xf]
    %v1479 = vld [vmem:[#allocation7 + $0x6c] sm:$0xf]
    %v1480 = vld [vmem:[#allocation7 + $0x70] sm:$0xf]
    %v1481 = vld [vmem:[#allocation7 + $0x74] sm:$0xf]
    %v1482 = vld [vmem:[#allocation7 + $0x78] sm:$0xf]
    %v1483 = vld [vmem:[#allocation7 + $0x7c] sm:$0xf]
    %v1484 = vld [vmem:[#allocation7 + $0x80] sm:$0xf]
    %v1485 = vld [vmem:[#allocation7 + $0x84] sm:$0xf]
    %v1486 = vld [vmem:[#allocation7 + $0x88] sm:$0xf]
    %v1487 = vld [vmem:[#allocation7 + $0x8c] sm:$0xf]
    %v1488 = vld [vmem:[#allocation7 + $0x90] sm:$0xf]
    %v1489 = vld [vmem:[#allocation7 + $0x94] sm:$0xf]
    %v1490 = vld [vmem:[#allocation7 + $0x98] sm:$0xf]
    %v1491 = vld [vmem:[#allocation7 + $0x9c] sm:$0xf]
    %v1492 = vld [vmem:[#allocation7 + $0xa0] sm:$0xf]
    %v1493 = vld [vmem:[#allocation7 + $0xa4] sm:$0xf]
    %v1494 = vld [vmem:[#allocation7 + $0xa8] sm:$0xf]
    %v1495 = vld [vmem:[#allocation7 + $0xac] sm:$0xf]
    %v1496 = vld [vmem:[#allocation7 + $0xb0] sm:$0xf]
    %v1497 = vld [vmem:[#allocation7 + $0xb4] sm:$0xf]
    %v1498 = vld [vmem:[#allocation7 + $0xb8] sm:$0xf]
    %v1499 = vld [vmem:[#allocation7 + $0xbc] sm:$0xf]
    %v1500 = vld [vmem:[#allocation7 + $0xc0] sm:$0xf]
    %v1501 = vld [vmem:[#allocation7 + $0xc4] sm:$0xf]
    %v1502 = vld [vmem:[#allocation7 + $0xc8] sm:$0xf]
    %v1503 = vld [vmem:[#allocation7 + $0xcc] sm:$0xf]
    %v1504 = vld [vmem:[#allocation7 + $0xd0] sm:$0xf]
    %v1505 = vld [vmem:[#allocation7 + $0xd4] sm:$0xf]
    %v1506 = vld [vmem:[#allocation7 + $0xd8] sm:$0xf]
    %v1507 = vld [vmem:[#allocation7 + $0xdc] sm:$0xf]
    %v1508 = vld [vmem:[#allocation7 + $0xe0] sm:$0xf]
    %v1509 = vld [vmem:[#allocation7 + $0xe4] sm:$0xf]
    %v1510 = vld [vmem:[#allocation7 + $0xe8] sm:$0xf]
    %v1511 = vld [vmem:[#allocation7 + $0xec] sm:$0xf]
    %v1512 = vld [vmem:[#allocation7 + $0xf0] sm:$0xf]
    %v1513 = vld [vmem:[#allocation7 + $0xf4] sm:$0xf]
    %v1514 = vld [vmem:[#allocation7 + $0xf8] sm:$0xf]
    %v1515 = vld [vmem:[#allocation7 + $0xfc] sm:$0xf]
    %v1516 = vld [vmem:[#allocation7 + $0x100] sm:$0xf]
    %v1517 = vld [vmem:[#allocation7 + $0x104] sm:$0xf]
    %v1518 = vld [vmem:[#allocation7 + $0x108] sm:$0xf]
    %v1519 = vld [vmem:[#allocation7 + $0x10c] sm:$0xf]
    %v1520 = vld [vmem:[#allocation7 + $0x110] sm:$0xf]
    %v1521 = vld [vmem:[#allocation7 + $0x114] sm:$0xf]
    %v1522 = vld [vmem:[#allocation7 + $0x118] sm:$0xf]
    %v1523 = vld [vmem:[#allocation7 + $0x11c] sm:$0xf]
    %v1524 = vld [vmem:[#allocation7 + $0x120] sm:$0xf]
    %v1525 = vld [vmem:[#allocation7 + $0x124] sm:$0xf]
    %v1526 = vld [vmem:[#allocation7 + $0x128] sm:$0xf]
    %v1527 = vld [vmem:[#allocation7 + $0x12c] sm:$0xf]
    %v1528 = vld [vmem:[#allocation7 + $0x130] sm:$0xf]
    %v1529 = vld [vmem:[#allocation7 + $0x134] sm:$0xf]
    %v1530 = vld [vmem:[#allocation7 + $0x138] sm:$0xf]
    %v1531 = vld [vmem:[#allocation7 + $0x13c] sm:$0xf]
    %v1532 = vld [vmem:[#allocation7 + $0x140] sm:$0xf]
    %v1533 = vld [vmem:[#allocation7 + $0x144] sm:$0xf]
    %v1534 = vld [vmem:[#allocation7 + $0x148] sm:$0xf]
    %v1535 = vld [vmem:[#allocation7 + $0x14c] sm:$0xf]
    %v1536 = vld [vmem:[#allocation7 + $0x150] sm:$0xf]
    %v1537 = vld [vmem:[#allocation7 + $0x154] sm:$0xf]
    %v1538 = vld [vmem:[#allocation7 + $0x158] sm:$0xf]
    %v1539 = vld [vmem:[#allocation7 + $0x15c] sm:$0xf]
    %v1540 = vld [vmem:[#allocation7 + $0x160] sm:$0xf]
    %v1541 = vld [vmem:[#allocation7 + $0x164] sm:$0xf]
    %v1542 = vld [vmem:[#allocation7 + $0x168] sm:$0xf]
    %v1543 = vld [vmem:[#allocation7 + $0x16c] sm:$0xf]
    %v1544 = vld [vmem:[#allocation7 + $0x170] sm:$0xf]
    %v1545 = vld [vmem:[#allocation7 + $0x174] sm:$0xf]
    %v1546 = vld [vmem:[#allocation7 + $0x178] sm:$0xf]
    %v1547 = vld [vmem:[#allocation7 + $0x17c] sm:$0xf]
    %v1548 = vld [vmem:[%s6] sm:$0x1]
    %v1550 = vlaneseq
    %v1551 = vshrl.u32 %v1550, 7
    %v1552 = vsub.s32 0, %v1551
    %v1553 = vrot.slane %v1548, %v1552
    %v1651 = vunpack.c.l.b16 %v1452
    %v1652 = vunpack.c.l.b16 %v1453
    %v1653 = vunpack.c.l.b16 %v1454
    %v1654 = vunpack.c.l.b16 %v1455
    %v1655 = vunpack.c.l.b16 %v1456
    %v1656 = vunpack.c.l.b16 %v1457
    %v1657 = vunpack.c.l.b16 %v1458
    %v1658 = vunpack.c.l.b16 %v1459
    %v1659 = vunpack.c.l.b16 %v1460
    %v1660 = vunpack.c.l.b16 %v1461
    %v1661 = vunpack.c.l.b16 %v1462
    %v1662 = vunpack.c.l.b16 %v1463
    %v1663 = vunpack.c.l.b16 %v1464
    %v1664 = vunpack.c.l.b16 %v1465
    %v1665 = vunpack.c.l.b16 %v1466
    %v1666 = vunpack.c.l.b16 %v1467
    %v1667 = vunpack.c.l.b16 %v1468
    %v1668 = vunpack.c.l.b16 %v1469
    %v1669 = vunpack.c.l.b16 %v1470
    %v1670 = vunpack.c.l.b16 %v1471
    %v1671 = vunpack.c.l.b16 %v1472
    %v1672 = vunpack.c.l.b16 %v1473
    %v1673 = vunpack.c.l.b16 %v1474
    %v1674 = vunpack.c.l.b16 %v1475
    %v1675 = vunpack.c.l.b16 %v1476
    %v1676 = vunpack.c.l.b16 %v1477
    %v1677 = vunpack.c.l.b16 %v1478
    %v1678 = vunpack.c.l.b16 %v1479
    %v1679 = vunpack.c.l.b16 %v1480
    %v1680 = vunpack.c.l.b16 %v1481
    %v1681 = vunpack.c.l.b16 %v1482
    %v1682 = vunpack.c.l.b16 %v1483
    %v1683 = vunpack.c.l.b16 %v1484
    %v1684 = vunpack.c.l.b16 %v1485
    %v1685 = vunpack.c.l.b16 %v1486
    %v1686 = vunpack.c.l.b16 %v1487
    %v1687 = vunpack.c.l.b16 %v1488
    %v1688 = vunpack.c.l.b16 %v1489
    %v1689 = vunpack.c.l.b16 %v1490
    %v1690 = vunpack.c.l.b16 %v1491
    %v1691 = vunpack.c.l.b16 %v1492
    %v1692 = vunpack.c.l.b16 %v1493
    %v1693 = vunpack.c.l.b16 %v1494
    %v1694 = vunpack.c.l.b16 %v1495
    %v1695 = vunpack.c.l.b16 %v1496
    %v1696 = vunpack.c.l.b16 %v1497
    %v1697 = vunpack.c.l.b16 %v1498
    %v1698 = vunpack.c.l.b16 %v1499
    %v1699 = vunpack.c.l.b16 %v1500
    %v1700 = vunpack.c.l.b16 %v1501
    %v1701 = vunpack.c.l.b16 %v1502
    %v1702 = vunpack.c.l.b16 %v1503
    %v1703 = vunpack.c.l.b16 %v1504
    %v1704 = vunpack.c.l.b16 %v1505
    %v1705 = vunpack.c.l.b16 %v1506
    %v1706 = vunpack.c.l.b16 %v1507
    %v1707 = vunpack.c.l.b16 %v1508
    %v1708 = vunpack.c.l.b16 %v1509
    %v1709 = vunpack.c.l.b16 %v1510
    %v1710 = vunpack.c.l.b16 %v1511
    %v1711 = vunpack.c.l.b16 %v1512
    %v1712 = vunpack.c.l.b16 %v1513
    %v1713 = vunpack.c.l.b16 %v1514
    %v1714 = vunpack.c.l.b16 %v1515
    %v1715 = vunpack.c.l.b16 %v1516
    %v1716 = vunpack.c.l.b16 %v1517
    %v1717 = vunpack.c.l.b16 %v1518
    %v1718 = vunpack.c.l.b16 %v1519
    %v1719 = vunpack.c.l.b16 %v1520
    %v1720 = vunpack.c.l.b16 %v1521
    %v1721 = vunpack.c.l.b16 %v1522
    %v1722 = vunpack.c.l.b16 %v1523
    %v1723 = vunpack.c.l.b16 %v1524
    %v1724 = vunpack.c.l.b16 %v1525
    %v1725 = vunpack.c.l.b16 %v1526
    %v1726 = vunpack.c.l.b16 %v1527
    %v1727 = vunpack.c.l.b16 %v1528
    %v1728 = vunpack.c.l.b16 %v1529
    %v1729 = vunpack.c.l.b16 %v1530
    %v1730 = vunpack.c.l.b16 %v1531
    %v1731 = vunpack.c.l.b16 %v1532
    %v1732 = vunpack.c.l.b16 %v1533
    %v1733 = vunpack.c.l.b16 %v1534
    %v1734 = vunpack.c.l.b16 %v1535
    %v1735 = vunpack.c.l.b16 %v1536
    %v1736 = vunpack.c.l.b16 %v1537
    %v1737 = vunpack.c.l.b16 %v1538
    %v1738 = vunpack.c.l.b16 %v1539
    %v1739 = vunpack.c.l.b16 %v1540
    %v1740 = vunpack.c.l.b16 %v1541
    %v1741 = vunpack.c.l.b16 %v1542
    %v1742 = vunpack.c.l.b16 %v1543
    %v1743 = vunpack.c.l.b16 %v1544
    %v1744 = vunpack.c.l.b16 %v1545
    %v1745 = vunpack.c.l.b16 %v1546
    %v1746 = vunpack.c.l.b16 %v1547
    %v1747 = vpack.c.b16 %v1652, %v1651
    %v1748 = vpack.c.b16 %v1654, %v1653
    %v1749 = vpack.c.b16 %v1656, %v1655
    %v1750 = vpack.c.b16 %v1658, %v1657
    %v1751 = vpack.c.b16 %v1660, %v1659
    %v1752 = vpack.c.b16 %v1662, %v1661
    %v1753 = vpack.c.b16 %v1664, %v1663
    %v1754 = vpack.c.b16 %v1666, %v1665
    %v1755 = vpack.c.b16 %v1668, %v1667
    %v1756 = vpack.c.b16 %v1670, %v1669
    %v1757 = vpack.c.b16 %v1672, %v1671
    %v1758 = vpack.c.b16 %v1674, %v1673
    %v1759 = vpack.c.b16 %v1676, %v1675
    %v1760 = vpack.c.b16 %v1678, %v1677
    %v1761 = vpack.c.b16 %v1680, %v1679
    %v1762 = vpack.c.b16 %v1682, %v1681
    %v1763 = vpack.c.b16 %v1684, %v1683
    %v1764 = vpack.c.b16 %v1686, %v1685
    %v1765 = vpack.c.b16 %v1688, %v1687
    %v1766 = vpack.c.b16 %v1690, %v1689
    %v1767 = vpack.c.b16 %v1692, %v1691
    %v1768 = vpack.c.b16 %v1694, %v1693
    %v1769 = vpack.c.b16 %v1696, %v1695
    %v1770 = vpack.c.b16 %v1698, %v1697
    %v1771 = vpack.c.b16 %v1700, %v1699
    %v1772 = vpack.c.b16 %v1702, %v1701
    %v1773 = vpack.c.b16 %v1704, %v1703
    %v1774 = vpack.c.b16 %v1706, %v1705
    %v1775 = vpack.c.b16 %v1708, %v1707
    %v1776 = vpack.c.b16 %v1710, %v1709
    %v1777 = vpack.c.b16 %v1712, %v1711
    %v1778 = vpack.c.b16 %v1714, %v1713
    %v1779 = vpack.c.b16 %v1716, %v1715
    %v1780 = vpack.c.b16 %v1718, %v1717
    %v1781 = vpack.c.b16 %v1720, %v1719
    %v1782 = vpack.c.b16 %v1722, %v1721
    %v1783 = vpack.c.b16 %v1724, %v1723
    %v1784 = vpack.c.b16 %v1726, %v1725
    %v1785 = vpack.c.b16 %v1728, %v1727
    %v1786 = vpack.c.b16 %v1730, %v1729
    %v1787 = vpack.c.b16 %v1732, %v1731
    %v1788 = vpack.c.b16 %v1734, %v1733
    %v1789 = vpack.c.b16 %v1736, %v1735
    %v1790 = vpack.c.b16 %v1738, %v1737
    %v1791 = vpack.c.b16 %v1740, %v1739
    %v1792 = vpack.c.b16 %v1742, %v1741
    %v1793 = vpack.c.b16 %v1744, %v1743
    %v1794 = vpack.c.b16 %v1746, %v1745
    %1843 = vmatprep.subr.bf16.mxu0 0
    %1844 = vmatpush1.bf16.msra.mxu0 %v1754
    %1845 = vmatprep.subr.bf16.mxu0 0
    %1846 = vmatpush1.bf16.msra.mxu0 %v1753
    %1847 = vmatprep.subr.bf16.mxu0 0
    %1848 = vmatpush1.bf16.msra.mxu0 %v1752
    %1849 = vmatprep.subr.bf16.mxu0 0
    %1850 = vmatpush1.bf16.msra.mxu0 %v1751
    %1851 = vmatprep.subr.bf16.mxu0 0
    %1852 = vmatpush1.bf16.msra.mxu0 %v1750
    %1853 = vmatprep.subr.bf16.mxu0 0
    %1854 = vmatpush1.bf16.msra.mxu0 %v1749
    %1855 = vmatprep.subr.bf16.mxu0 0
    %1856 = vmatpush1.bf16.msra.mxu0 %v1748
    %1857 = vmatprep.subr.bf16.mxu0 0
    %1858 = vmatpush1.bf16.msra.mxu0 %v1747
    %1859 = vmatprep.subr.bf16.mxu0 0
    %1860 = vmatpush2.bf16.msra.mxu0 %v1762
    %1861 = vmatprep.subr.bf16.mxu0 0
    %1862 = vmatpush2.bf16.msra.mxu0 %v1761
    %1863 = vmatprep.subr.bf16.mxu0 0
    %1864 = vmatpush2.bf16.msra.mxu0 %v1760
    %1865 = vmatprep.subr.bf16.mxu0 0
    %1866 = vmatpush2.bf16.msra.mxu0 %v1759
    %1867 = vmatprep.subr.bf16.mxu0 0
    %1868 = vmatpush2.bf16.msra.mxu0 %v1758
    %1869 = vmatprep.subr.bf16.mxu0 0
    %1870 = vmatpush2.bf16.msra.mxu0 %v1757
    %1871 = vmatprep.subr.bf16.mxu0 0
    %1872 = vmatpush2.bf16.msra.mxu0 %v1756
    %1873 = vmatprep.subr.bf16.mxu0 0
    %1874 = vmatpush2.bf16.msra.mxu0 %v1755
    %1875 = vmatprep.mubr.bf16.mxu0 %v1447
    %1876 = vmatmul.mubr.bf16.gmra.mxu0 %v1446
    %v1877 = vpop.f32.mrf.mxu0
    %v1878 = vadd.f32 %v1553, %v1877
    %v1879 = vpop.f32.mrf.mxu0
    %v1880 = vpop.f32.mrf.mxu0
    %v1881 = vpop.f32.mrf.mxu0
    %1882 = vdwg.mxu0
    %1883 = vmatprep.subr.bf16.mxu0 0
    %1884 = vmatpush1.bf16.msra.mxu0 %v1770
    %1885 = vmatprep.subr.bf16.mxu0 0
    %1886 = vmatpush1.bf16.msra.mxu0 %v1769
    %1887 = vmatprep.subr.bf16.mxu0 0
    %1888 = vmatpush1.bf16.msra.mxu0 %v1768
    %1889 = vmatprep.subr.bf16.mxu0 0
    %1890 = vmatpush1.bf16.msra.mxu0 %v1767
    %1891 = vmatprep.subr.bf16.mxu0 0
    %1892 = vmatpush1.bf16.msra.mxu0 %v1766
    %1893 = vmatprep.subr.bf16.mxu0 0
    %1894 = vmatpush1.bf16.msra.mxu0 %v1765
    %1895 = vmatprep.subr.bf16.mxu0 0
    %1896 = vmatpush1.bf16.msra.mxu0 %v1764
    %1897 = vmatprep.subr.bf16.mxu0 0
    %1898 = vmatpush1.bf16.msra.mxu0 %v1763
    %1899 = vmatprep.subr.bf16.mxu0 0
    %1900 = vmatpush2.bf16.msra.mxu0 %v1778
    %1901 = vmatprep.subr.bf16.mxu0 0
    %1902 = vmatpush2.bf16.msra.mxu0 %v1777
    %1903 = vmatprep.subr.bf16.mxu0 0
    %1904 = vmatpush2.bf16.msra.mxu0 %v1776
    %1905 = vmatprep.subr.bf16.mxu0 0
    %1906 = vmatpush2.bf16.msra.mxu0 %v1775
    %1907 = vmatprep.subr.bf16.mxu0 0
    %1908 = vmatpush2.bf16.msra.mxu0 %v1774
    %1909 = vmatprep.subr.bf16.mxu0 0
    %1910 = vmatpush2.bf16.msra.mxu0 %v1773
    %1911 = vmatprep.subr.bf16.mxu0 0
    %1912 = vmatpush2.bf16.msra.mxu0 %v1772
    %1913 = vmatprep.subr.bf16.mxu0 0
    %1914 = vmatpush2.bf16.msra.mxu0 %v1771
    %1915 = vmatprep.mubr.bf16.mxu0 %v1449
    %1916 = vmatmul.mubr.bf16.gmra.mxu0 %v1448
    %v1917 = vpop.f32.mrf.mxu0
    %v1918 = vadd.f32 %v1878, %v1917
    %v1919 = vpop.f32.mrf.mxu0
    %v1920 = vpop.f32.mrf.mxu0
    %v1921 = vpop.f32.mrf.mxu0
    %1922 = vdwg.mxu0
    %1923 = vmatprep.subr.bf16.mxu0 0
    %1924 = vmatpush1.bf16.msra.mxu0 %v1786
    %1925 = vmatprep.subr.bf16.mxu0 0
    %1926 = vmatpush1.bf16.msra.mxu0 %v1785
    %1927 = vmatprep.subr.bf16.mxu0 0
    %1928 = vmatpush1.bf16.msra.mxu0 %v1784
    %1929 = vmatprep.subr.bf16.mxu0 0
    %1930 = vmatpush1.bf16.msra.mxu0 %v1783
    %1931 = vmatprep.subr.bf16.mxu0 0
    %1932 = vmatpush1.bf16.msra.mxu0 %v1782
    %1933 = vmatprep.subr.bf16.mxu0 0
    %1934 = vmatpush1.bf16.msra.mxu0 %v1781
    %1935 = vmatprep.subr.bf16.mxu0 0
    %1936 = vmatpush1.bf16.msra.mxu0 %v1780
    %1937 = vmatprep.subr.bf16.mxu0 0
    %1938 = vmatpush1.bf16.msra.mxu0 %v1779
    %1939 = vmatprep.subr.bf16.mxu0 0
    %1940 = vmatpush2.bf16.msra.mxu0 %v1794
    %1941 = vmatprep.subr.bf16.mxu0 0
    %1942 = vmatpush2.bf16.msra.mxu0 %v1793
    %1943 = vmatprep.subr.bf16.mxu0 0
    %1944 = vmatpush2.bf16.msra.mxu0 %v1792
    %1945 = vmatprep.subr.bf16.mxu0 0
    %1946 = vmatpush2.bf16.msra.mxu0 %v1791
    %1947 = vmatprep.subr.bf16.mxu0 0
    %1948 = vmatpush2.bf16.msra.mxu0 %v1790
    %1949 = vmatprep.subr.bf16.mxu0 0
    %1950 = vmatpush2.bf16.msra.mxu0 %v1789
    %1951 = vmatprep.subr.bf16.mxu0 0
    %1952 = vmatpush2.bf16.msra.mxu0 %v1788
    %1953 = vmatprep.subr.bf16.mxu0 0
    %1954 = vmatpush2.bf16.msra.mxu0 %v1787
    %1955 = vmatprep.mubr.bf16.mxu0 %v1451
    %1956 = vmatmul.mubr.bf16.gmra.mxu0 %v1450
    %v1957 = vpop.f32.mrf.mxu0
    %v1958 = vadd.f32 %v1918, %v1957
    %v1959 = vpop.f32.mrf.mxu0
    %v1960 = vpop.f32.mrf.mxu0
    %v1961 = vpop.f32.mrf.mxu0
    %1962 = vdwg.mxu0
    %1963 = vst [vmem:[#allocation8] sm:$0x3] %v1958
    // Predicated region
    $region42: #{cnn_forward.1} parent=1 // pred_check
      _
    $region43: #{cnn_forward.1} parent=1 // pred_check_branch
      %1965 = sbr.rel (0) target = $region45
    $region44: #{cnn_forward.1} parent=1 // pred_region
      %s1967 = ssub.s32 32, 32
      %1968 = vsyncadd [#allocation4], %s1967
      %s1970 = sshll.u32 [#allocation8], 4
      %s1971 = int_to_ptr.vmem [resolvable:$true] %s1970
      %1973 = dma.vmem_to_hbm [thread:$0]  %s1971, 32, %s7, [#allocation4]
    $region45: #{cnn_forward.1} parent=1 // pred_fallthru
      _
    // Predicated region
    $region46: #{cnn_forward.1} parent=1 // pred_check
      _
    $region47: #{cnn_forward.1} parent=1 // pred_check_branch
      %1975 = sbr.rel (0) target = $region49
    $region48: #{cnn_forward.1} parent=1 // pred_region
      %1976 = dma.done [#allocation4], 32
    $region49: #{cnn_forward.1} parent=1 // pred_fallthru
      _
    %1977 = vsyncpa [#allocation3], 1
    %1978 = vsyncpa [#allocation6], 1
    %1979 = vsyncpa [#allocation4], 1

</llo_original>
